<compile_context>
chip_gen: v7x
topology: tpu7x:2x2x1
jax: 0.10.0
libtpu: 0.0.40
codegen_flags: <defaults>
</compile_context>

<pallas_src>
import jax
import jax.numpy as jnp
from jax.experimental import pallas as pl
from jax.experimental.pallas import tpu as pltpu

K = 3              # DANet "k": number of locality masks == conv groups
BN_EPS = 1e-5      # BatchNorm1d default eps
LANE = 128         # TPU lane width; all kernel column layouts are multiples of this
ALIGN_B = 16       # batch-tile alignment (bf16 sublane packing)
MM_DTYPE = jnp.bfloat16


def round_up(v, m):
    return ((v + m - 1) // m) * m


# ---------------------------------------------------------------------------
# Parameter setup (plain JAX glue — parameters only, not the hot path)
# ---------------------------------------------------------------------------
def entmax15(z, axis=-1):
    """1.5-entmax (LearnableLocality's sparse mask), reference algorithm."""
    z = z / 2.0
    z = z - jnp.max(z, axis=axis, keepdims=True)
    z_sorted = -jnp.sort(-z, axis=axis)                      # descending
    n = z.shape[axis]
    rho = jnp.arange(1, n + 1, dtype=z.dtype)
    mean = jnp.cumsum(z_sorted, axis=axis) / rho
    mean_sq = jnp.cumsum(z_sorted * z_sorted, axis=axis) / rho
    ss = rho * (mean_sq - mean * mean)
    delta = (1.0 - ss) / rho
    tau = mean - jnp.sqrt(jnp.clip(delta, 0.0))
    support = jnp.sum((tau <= z_sorted).astype(jnp.int32), axis=axis, keepdims=True)
    tau_star = jnp.take_along_axis(tau, support - 1, axis=axis)
    return jnp.square(jnp.clip(z - tau_star, 0.0))


def make_abstract_layer_params(key, d_in, d_out):
    """Raw AbstractLayer params: entmax15 mask + grouped 1x1 conv + folded eval-GBN."""
    k_mask, k_w, k_b = jax.random.split(key, 3)
    mask = entmax15(jax.random.uniform(k_mask, (K, d_in), jnp.float32), axis=-1)
    w = jax.random.normal(k_w, (K, d_in, 2 * d_out), jnp.float32) / jnp.sqrt(
        jnp.float32(d_in))
    lim = 1.0 / float(d_in) ** 0.5
    b = jax.random.uniform(k_b, (K, 2 * d_out), jnp.float32, minval=-lim, maxval=lim)
    # Fold eval-mode ghost batch norm (identity affine, running stats 0/1).
    bn_scale = 1.0 / jnp.sqrt(1.0 + BN_EPS)
    return mask, w * bn_scale, b * bn_scale


def _fold_half(mask, w, b, slab):
    """Fold the locality mask into the grouped conv weights; lay the K groups out
    contiguously and split into a gate slab and a linear slab, each zero-padded to
    `slab` (multiple of 128) columns so every kernel-side slice is lane-aligned."""
    d_out = w.shape[2] // 2
    wf = mask[:, :, None] * w                                 # [K, d_in, 2*d_out]
    gate_w = jnp.concatenate([wf[g, :, :d_out] for g in range(K)], axis=1)
    lin_w = jnp.concatenate([wf[g, :, d_out:] for g in range(K)], axis=1)
    gate_b = jnp.concatenate([b[g, :d_out] for g in range(K)])
    lin_b = jnp.concatenate([b[g, d_out:] for g in range(K)])
    pad = slab - K * d_out
    gate_w = jnp.pad(gate_w, ((0, 0), (0, pad)))
    lin_w = jnp.pad(lin_w, ((0, 0), (0, pad)))
    gate_b = jnp.pad(gate_b, (0, pad))
    lin_b = jnp.pad(lin_b, (0, pad))
    return gate_w, lin_w, gate_b, lin_b


def _group_sum_matrix(d_out, slab, pad_out):
    """Stacked-identity matrix S: dot(p, S) sums the K per-group GLU products on the
    MXU (the per-group slices are not 128-aligned, so a slice-and-add reduction would
    force cross-lane relayout work on the VPU/XLU)."""
    s = jnp.zeros((slab, pad_out), jnp.float32)
    eye = jnp.eye(d_out, dtype=jnp.float32)
    for g in range(K):
        s = s.at[g * d_out:(g + 1) * d_out, :d_out].set(eye)
    return s


def prepare_params(raw_block_params, clf_params, in_features, hidden, num_classes,
                   mm_dtype=MM_DTYPE):
    """Build the lane-aligned, bf16, fused weight set consumed by the kernel."""
    half = hidden // 2
    slab_h = round_up(K * half, LANE)       # conv1 gate/lin slab width
    slab_f = round_up(K * hidden, LANE)     # conv2 / downsample gate/lin slab width
    pad_h = round_up(half, LANE)            # padded conv1 output width
    pad_f = round_up(hidden, LANE)          # padded conv2 / block output width
    out_w = round_up(num_classes, LANE)     # lane-dense logits slab width
    num_blocks = len(raw_block_params)

    w_x_cols = []
    per_block = []
    for blk, (p1, p2, p3) in enumerate(raw_block_params):
        g1w, l1w, g1b, l1b = _fold_half(*p1, slab=slab_h)     # conv1
        g2w, l2w, g2b, l2b = _fold_half(*p2, slab=slab_f)     # conv2
        g3w, l3w, g3b, l3b = _fold_half(*p3, slab=slab_f)     # downsample (input: x)

        # Fused conv1+downsample column layout: [gate1 | gate3 | lin1 | lin3].
        if blk == 0:
            # Block 0: conv1 also reads x, so it lives entirely in the x-rows.
            w_x_cols.append(jnp.concatenate([g1w, g3w, l1w, l3w], axis=1))
        else:
            z_h = jnp.zeros((in_features, slab_h), jnp.float32)
            w_x_cols.append(jnp.concatenate([z_h, g3w, z_h, l3w], axis=1))
            z_f = jnp.zeros((hidden, slab_f), jnp.float32)
            w13 = jnp.concatenate([g1w, z_f, l1w, z_f], axis=1)       # pre-dependent rows
            w13 = jnp.pad(w13, ((0, pad_f - hidden), (0, 0))).astype(mm_dtype)
        b13 = jnp.concatenate([g1b, g3b, l1b, l3b])[None, :]

        w2 = jnp.concatenate([g2w, l2w], axis=1)                      # [half, 2*slab_f]
        w2 = jnp.pad(w2, ((0, pad_h - half), (0, 0))).astype(mm_dtype)
        b2 = jnp.concatenate([g2b, l2b])[None, :]

        if blk == 0:
            per_block.extend([b13, w2, b2])
        else:
            per_block.extend([w13, b13, w2, b2])

    # All blocks' x-dependent rows hoisted into ONE wide matmul done once per tile.
    w_x_all = jnp.concatenate(w_x_cols, axis=1).astype(mm_dtype)      # [d_in, nb*fused_w]

    s_half = _group_sum_matrix(half, slab_h, pad_h)
    s_full = _group_sum_matrix(hidden, slab_f, pad_f)

    wc1, bc1, wc2, bc2 = clf_params
    wc1p = jnp.zeros((pad_f, pad_h), jnp.float32).at[:hidden, :half].set(wc1).astype(mm_dtype)
    bc1p = jnp.zeros((1, pad_h), jnp.float32).at[:, :half].set(bc1)
    wc2p = jnp.zeros((pad_h, out_w), jnp.float32).at[:half, :num_classes].set(wc2).astype(mm_dtype)
    bc2p = jnp.zeros((1, out_w), jnp.float32).at[:, :num_classes].set(bc2)

    flat_params = [w_x_all, s_half, s_full] + per_block + [wc1p, bc1p, wc2p, bc2p]
    layout = dict(num_blocks=num_blocks, slab_h=slab_h, slab_f=slab_f, out_w=out_w)
    return flat_params, layout


# ---------------------------------------------------------------------------
# Fused Pallas kernel
# ---------------------------------------------------------------------------
def make_danet_kernel(num_blocks, slab_h, slab_f, mm_dtype=MM_DTYPE):
    fused_w = 2 * (slab_h + slab_f)   # fused conv1+downsample output width (128-mult)
    gl_split = slab_h + slab_f        # gate/lin split point (128-aligned)

    def kernel(*refs):
        x_ref = refs[0]
        w_x_ref, s_h_ref, s_f_ref = refs[1:4]
        out_ref = refs[-1]
        params = refs[4:-1]

        # One fat matmul covering every block's x-dependent rows (downsample branches
        # + block0 conv1); the per-block slices below are all 128-aligned.
        x_contrib = jnp.dot(x_ref[...], w_x_ref[...],
                            preferred_element_type=jnp.float32)
        s_h = s_h_ref[...]
        s_f = s_f_ref[...]

        def glu(h, split):
            # Padded gate columns see sigmoid(0)=0.5 but their linear columns are 0,
            # so padded outputs stay exactly zero.
            return jnp.maximum(jax.nn.sigmoid(h[:, :split]) * h[:, split:], 0.0)

        pre = None
        idx = 0
        # TODO(synk): for deep DANets (many blocks) move this unrolled loop onto an
        # "arbitrary" grid axis over stacked per-block weights to bound live ranges.
        for blk in range(num_blocks):
            xc = x_contrib[:, blk * fused_w:(blk + 1) * fused_w]
            if blk == 0:
                b13 = params[idx][...]
                w2_ref = params[idx + 1]
                b2 = params[idx + 2][...]
                idx += 3
                h13 = xc + b13
            else:
                w13_ref = params[idx]
                b13 = params[idx + 1][...]
                w2_ref = params[idx + 2]
                b2 = params[idx + 3][...]
                idx += 4
                h13 = jnp.dot(pre.astype(mm_dtype), w13_ref[...],
                              preferred_element_type=jnp.float32) + xc + b13
            p13 = glu(h13, gl_split)                                   # [tb, gl_split]
            o1 = jnp.dot(p13[:, :slab_h], s_h,
                         preferred_element_type=jnp.float32)           # conv1 group-sum
            ident = jnp.dot(p13[:, slab_h:], s_f,
                            preferred_element_type=jnp.float32)        # downsample group-sum
            h2 = jnp.dot(o1.astype(mm_dtype), w2_ref[...],
                         preferred_element_type=jnp.float32) + b2      # conv2
            o2 = jnp.dot(glu(h2, slab_f), s_f,
                         preferred_element_type=jnp.float32)           # conv2 group-sum
            s = o2 + ident
            pre = jnp.where(s >= 0.0, s, 0.01 * s)                     # LeakyReLU(0.01)

        # Classifier: Linear -> ReLU -> Linear (lane-dense padded logits slab).
        wc1_ref, bc1_ref, wc2_ref, bc2_ref = params[idx:idx + 4]
        h = jnp.maximum(
            jnp.dot(pre.astype(mm_dtype), wc1_ref[...],
                    preferred_element_type=jnp.float32) + bc1_ref[...], 0.0)
        logits = jnp.dot(h.astype(mm_dtype), wc2_ref[...],
                         preferred_element_type=jnp.float32) + bc2_ref[...]
        out_ref[...] = logits.astype(out_ref.dtype)

    return kernel


# ---------------------------------------------------------------------------
# Wrapper: single pallas_call, batch grid, resident weights
# ---------------------------------------------------------------------------
def danet_forward(x, flat_params, layout, num_classes, mm_dtype=MM_DTYPE, max_tb=1024):
    batch, d_in = x.shape
    num_blocks = layout["num_blocks"]
    slab_h, slab_f, out_w = layout["slab_h"], layout["slab_f"], layout["out_w"]

    # Batch tiling: big tiles (fixed ~0.35us/grid-step overhead dominates small ones),
    # 16-row aligned for bf16 packing, and >=2 grid steps when the batch allows it so
    # dimension_semantics=("parallel",) has something to shard across v7x's 2 cores.
    b_round = round_up(batch, ALIGN_B)
    tb = max(ALIGN_B, (min(max_tb, b_round) // ALIGN_B) * ALIGN_B)
    if b_round // tb < 2 and b_round >= 2 * ALIGN_B:
        tb = round_up(b_round // 2, ALIGN_B)
    b_pad = round_up(b_round, tb)
    n_steps = b_pad // tb

    x_p = x.astype(mm_dtype)
    if b_pad != batch:
        x_p = jnp.pad(x_p, ((0, b_pad - batch), (0, 0)))

    kernel = make_danet_kernel(num_blocks, slab_h, slab_f, mm_dtype)

    # Weights: constant block index -> resident in VMEM across all batch tiles.
    # TODO(synk): at production widths single-buffer these (pipeline_mode) to halve
    # their resident footprint on v7x's 64 MiB VMEM.
    weight_specs = [pl.BlockSpec(p.shape, lambda i: (0, 0)) for p in flat_params]

    # Explicit VMEM budget: 2x (double-buffered) weights + io tiles + headroom for the
    # unrolled per-block intermediates; clamped to [32 MiB, 64 MiB] (v7x physical).
    weight_bytes = sum(int(p.size) * p.dtype.itemsize for p in flat_params)
    act_bytes = tb * (num_blocks + 4) * 2 * (slab_h + slab_f) * 4
    vmem_budget = int(min(max(2 * weight_bytes + act_bytes + (8 << 20), 32 << 20),
                          64 << 20))

    out = pl.pallas_call(
        kernel,
        out_shape=jax.ShapeDtypeStruct((b_pad, out_w), jnp.bfloat16),
        grid=(n_steps,),
        in_specs=[pl.BlockSpec((tb, d_in), lambda i: (i, 0))] + weight_specs,
        out_specs=pl.BlockSpec((tb, out_w), lambda i: (i, 0)),
        compiler_params=pltpu.CompilerParams(
            dimension_semantics=("parallel",),
            vmem_limit_bytes=vmem_budget),
    )(x_p, *flat_params)

    # Lane-dense bf16 logits slab: slice the real classes and upcast outside.
    # TODO(synk): on v5e an unpadded (batch, num_classes) f32 output (masked stores)
    # may win over the padded bf16 slab; benchmark both.
    return out[:batch, :num_classes].astype(jnp.float32)


# ---------------------------------------------------------------------------
# Pure-JAX reference (uses the raw, unfolded parameters, all f32)
# ---------------------------------------------------------------------------
def _abstract_layer_ref(x, mask, w, b):
    d_out = w.shape[2] // 2
    acc = jnp.zeros((x.shape[0], d_out), jnp.float32)
    for g in range(K):
        h = (x * mask[g][None, :]) @ w[g] + b[g][None, :]
        acc = acc + jnp.maximum(jax.nn.sigmoid(h[:, :d_out]) * h[:, d_out:], 0.0)
    return acc


def _danet_ref(x, raw_block_params, clf_params):
    def block(xin, pre, p1, p2, p3):
        o = _abstract_layer_ref(pre, *p1)
        o = _abstract_layer_ref(o, *p2)
        s = o + _abstract_layer_ref(xin, *p3)
        return jnp.where(s >= 0.0, s, 0.01 * s)

    out = block(x, x, *raw_block_params[0])
    for blk in raw_block_params[1:]:
        out = block(x, out, *blk)
    w1, b1, w2, b2 = clf_params
    h = jnp.maximum(out @ w1 + b1, 0.0)
    return h @ w2 + b2


# ---------------------------------------------------------------------------
if __name__ == "__main__":
    # Module hyper-parameters (small, consistent with the PyTorch __init__).
    in_features = 16
    num_layers = 4
    hidden_size = 32
    num_classes = 3
    dropout = 0.1            # inference: identity
    virtual_batch = 4        # GBN virtual batch size: unused in eval mode
    batch = 8

    key = jax.random.PRNGKey(0)
    k_x, k_clf1, k_clf2, k_blocks = jax.random.split(key, 4)

    x = jax.random.normal(k_x, (batch, in_features), jnp.float32)

    # Blocks: features = [DANetBlock(in_features), DANetBlock(hidden)*(num_layers//2-1),
    # Dropout] (the trailing Dropout is never invoked by forward(); identity anyway).
    num_blocks = num_layers // 2
    block_keys = jax.random.split(k_blocks, num_blocks)
    raw_block_params = []
    for i in range(num_blocks):
        d_in = in_features if i == 0 else hidden_size
        kk = jax.random.split(block_keys[i], 3)
        p1 = make_abstract_layer_params(kk[0], d_in, hidden_size // 2)         # conv1
        p2 = make_abstract_layer_params(kk[1], hidden_size // 2, hidden_size)  # conv2
        p3 = make_abstract_layer_params(kk[2], in_features, hidden_size)       # downsample
        raw_block_params.append((p1, p2, p3))

    # Classifier: Linear(hidden, hidden//2) -> ReLU -> Linear(hidden//2, classes)
    wc1 = jax.random.normal(k_clf1, (hidden_size, hidden_size // 2), jnp.float32) / jnp.sqrt(
        jnp.float32(hidden_size))
    bc1 = jnp.zeros((1, hidden_size // 2), jnp.float32)
    wc2 = jax.random.normal(k_clf2, (hidden_size // 2, num_classes), jnp.float32) / jnp.sqrt(
        jnp.float32(hidden_size // 2))
    bc2 = jnp.zeros((1, num_classes), jnp.float32)
    clf_params = (wc1, bc1, wc2, bc2)

    # Kernel-side parameter prep: fold masks + eval-GBN, fuse conv1/downsample,
    # lane-align all slabs, build group-sum matrices, cast matmul weights to bf16.
    flat_params, layout = prepare_params(
        raw_block_params, clf_params, in_features, hidden_size, num_classes)

    out = danet_forward(x, flat_params, layout, num_classes)
    out = jax.block_until_ready(out)

    ref = jax.block_until_ready(_danet_ref(x, raw_block_params, clf_params))
    assert out.shape == (batch, num_classes)
    # bf16 matmuls + bf16 logits store -> looser tolerance than the pure-f32 path.
    assert jnp.allclose(out, ref, atol=5e-2, rtol=5e-2), "kernel/reference mismatch"

    print("KERNEL_OK")
</pallas_src>

<mosaic_0001>
module attributes {stable_mosaic.version = 11 : i64} {
  func.func @kernel(%arg0: i32, %arg1: memref<16x16xbf16, #tpu.memory_space<vmem>>, %arg2: memref<16x1024xbf16, #tpu.memory_space<vmem>>, %arg3: memref<128x128xf32, #tpu.memory_space<vmem>>, %arg4: memref<128x128xf32, #tpu.memory_space<vmem>>, %arg5: memref<1x512xf32, #tpu.memory_space<vmem>>, %arg6: memref<128x256xbf16, #tpu.memory_space<vmem>>, %arg7: memref<1x256xf32, #tpu.memory_space<vmem>>, %arg8: memref<128x512xbf16, #tpu.memory_space<vmem>>, %arg9: memref<1x512xf32, #tpu.memory_space<vmem>>, %arg10: memref<128x256xbf16, #tpu.memory_space<vmem>>, %arg11: memref<1x256xf32, #tpu.memory_space<vmem>>, %arg12: memref<128x128xbf16, #tpu.memory_space<vmem>>, %arg13: memref<1x128xf32, #tpu.memory_space<vmem>>, %arg14: memref<128x128xbf16, #tpu.memory_space<vmem>>, %arg15: memref<1x128xf32, #tpu.memory_space<vmem>>, %arg16: memref<16x128xbf16, #tpu.memory_space<vmem>>) attributes {dimension_semantics = [#tpu.dimension_semantics<parallel>], iteration_bounds = array<i64: 1>, scalar_prefetch = 0 : i64, scratch_operands = 0 : i64, tpu.core_type = #tpu.core_type<tc>, window_params = [{transform_indices = @transform_0, window_bounds = array<i64: 16, 16>}, {pipeline_mode = #tpu.pipeline_mode<synchronous>, transform_indices = @transform_1, window_bounds = array<i64: 16, 1024>}, {pipeline_mode = #tpu.pipeline_mode<synchronous>, transform_indices = @transform_2, window_bounds = array<i64: 128, 128>}, {pipeline_mode = #tpu.pipeline_mode<synchronous>, transform_indices = @transform_3, window_bounds = array<i64: 128, 128>}, {pipeline_mode = #tpu.pipeline_mode<synchronous>, transform_indices = @transform_4, window_bounds = array<i64: 1, 512>}, {pipeline_mode = #tpu.pipeline_mode<synchronous>, transform_indices = @transform_5, window_bounds = array<i64: 128, 256>}, {pipeline_mode = #tpu.pipeline_mode<synchronous>, transform_indices = @transform_6, window_bounds = array<i64: 1, 256>}, {pipeline_mode = #tpu.pipeline_mode<synchronous>, transform_indices = @transform_7, window_bounds = array<i64: 128, 512>}, {pipeline_mode = #tpu.pipeline_mode<synchronous>, transform_indices = @transform_8, window_bounds = array<i64: 1, 512>}, {pipeline_mode = #tpu.pipeline_mode<synchronous>, transform_indices = @transform_9, window_bounds = array<i64: 128, 256>}, {pipeline_mode = #tpu.pipeline_mode<synchronous>, transform_indices = @transform_10, window_bounds = array<i64: 1, 256>}, {pipeline_mode = #tpu.pipeline_mode<synchronous>, transform_indices = @transform_11, window_bounds = array<i64: 128, 128>}, {pipeline_mode = #tpu.pipeline_mode<synchronous>, transform_indices = @transform_12, window_bounds = array<i64: 1, 128>}, {pipeline_mode = #tpu.pipeline_mode<synchronous>, transform_indices = @transform_13, window_bounds = array<i64: 128, 128>}, {pipeline_mode = #tpu.pipeline_mode<synchronous>, transform_indices = @transform_14, window_bounds = array<i64: 1, 128>}, {transform_indices = @transform_15, window_bounds = array<i64: 16, 128>}]} {
    %c0 = arith.constant 0 : index
    %c0_0 = arith.constant 0 : index
    %0 = vector.load %arg1[%c0, %c0_0] : memref<16x16xbf16, #tpu.memory_space<vmem>>, vector<16x16xbf16>
    %c0_1 = arith.constant 0 : index
    %c0_2 = arith.constant 0 : index
    %1 = vector.load %arg2[%c0_1, %c0_2] : memref<16x1024xbf16, #tpu.memory_space<vmem>>, vector<16x1024xbf16>
    %cst = arith.constant dense<0.000000e+00> : vector<16x1024xf32>
    %2 = tpu.matmul %0, %1, %cst {dimension_numbers = #tpu.dot_dimension_numbers<[1], [0], [0], [1], [0, 0, 1, 1], [], []>} : vector<16x16xbf16>, vector<16x1024xbf16>, vector<16x1024xf32> -> vector<16x1024xf32>
    %c0_3 = arith.constant 0 : index
    %c0_4 = arith.constant 0 : index
    %3 = vector.load %arg3[%c0_3, %c0_4] : memref<128x128xf32, #tpu.memory_space<vmem>>, vector<128x128xf32>
    %c0_5 = arith.constant 0 : index
    %c0_6 = arith.constant 0 : index
    %4 = vector.load %arg4[%c0_5, %c0_6] : memref<128x128xf32, #tpu.memory_space<vmem>>, vector<128x128xf32>
    %5 = vector.extract_strided_slice %2 {offsets = [0, 0], sizes = [16, 512], strides = [1, 1]} : vector<16x1024xf32> to vector<16x512xf32>
    %c0_7 = arith.constant 0 : index
    %c0_8 = arith.constant 0 : index
    %6 = vector.load %arg5[%c0_7, %c0_8] : memref<1x512xf32, #tpu.memory_space<vmem>>, vector<1x512xf32>
    %c0_9 = arith.constant 0 : index
    %c0_10 = arith.constant 0 : index
    %7 = vector.load %arg7[%c0_9, %c0_10] : memref<1x256xf32, #tpu.memory_space<vmem>>, vector<1x256xf32>
    %8 = vector.broadcast %6 : vector<1x512xf32> to vector<16x512xf32>
    %9 = arith.addf %5, %8 : vector<16x512xf32>
    %10 = vector.extract_strided_slice %9 {offsets = [0, 0], sizes = [16, 256], strides = [1, 1]} : vector<16x512xf32> to vector<16x256xf32>
    %11 = arith.negf %10 : vector<16x256xf32>
    %12 = math.exp %11 : vector<16x256xf32>
    %cst_11 = arith.constant 1.000000e+00 : f32
    %13 = vector.broadcast %cst_11 : f32 to vector<16x256xf32>
    %14 = arith.addf %13, %12 : vector<16x256xf32>
    %15 = arith.divf %13, %14 : vector<16x256xf32>
    %16 = vector.extract_strided_slice %9 {offsets = [0, 256], sizes = [16, 256], strides = [1, 1]} : vector<16x512xf32> to vector<16x256xf32>
    %17 = arith.mulf %15, %16 : vector<16x256xf32>
    %cst_12 = arith.constant 0.000000e+00 : f32
    %18 = vector.broadcast %cst_12 : f32 to vector<16x256xf32>
    %19 = arith.maximumf %17, %18 : vector<16x256xf32>
    %20 = vector.extract_strided_slice %19 {offsets = [0, 0], sizes = [16, 128], strides = [1, 1]} : vector<16x256xf32> to vector<16x128xf32>
    %cst_13 = arith.constant dense<0.000000e+00> : vector<16x128xf32>
    %21 = tpu.matmul %20, %3, %cst_13 {dimension_numbers = #tpu.dot_dimension_numbers<[1], [0], [0], [1], [0, 0, 1, 1], [], []>} : vector<16x128xf32>, vector<128x128xf32>, vector<16x128xf32> -> vector<16x128xf32>
    %22 = vector.extract_strided_slice %19 {offsets = [0, 128], sizes = [16, 128], strides = [1, 1]} : vector<16x256xf32> to vector<16x128xf32>
    %cst_14 = arith.constant dense<0.000000e+00> : vector<16x128xf32>
    %23 = tpu.matmul %22, %4, %cst_14 {dimension_numbers = #tpu.dot_dimension_numbers<[1], [0], [0], [1], [0, 0, 1, 1], [], []>} : vector<16x128xf32>, vector<128x128xf32>, vector<16x128xf32> -> vector<16x128xf32>
    %24 = arith.truncf %21 : vector<16x128xf32> to vector<16x128xbf16>
    %c0_15 = arith.constant 0 : index
    %c0_16 = arith.constant 0 : index
    %25 = vector.load %arg6[%c0_15, %c0_16] : memref<128x256xbf16, #tpu.memory_space<vmem>>, vector<128x256xbf16>
    %cst_17 = arith.constant dense<0.000000e+00> : vector<16x256xf32>
    %26 = tpu.matmul %24, %25, %cst_17 {dimension_numbers = #tpu.dot_dimension_numbers<[1], [0], [0], [1], [0, 0, 1, 1], [], []>} : vector<16x128xbf16>, vector<128x256xbf16>, vector<16x256xf32> -> vector<16x256xf32>
    %27 = vector.broadcast %7 : vector<1x256xf32> to vector<16x256xf32>
    %28 = arith.addf %26, %27 : vector<16x256xf32>
    %29 = vector.extract_strided_slice %28 {offsets = [0, 0], sizes = [16, 128], strides = [1, 1]} : vector<16x256xf32> to vector<16x128xf32>
    %30 = arith.negf %29 : vector<16x128xf32>
    %31 = math.exp %30 : vector<16x128xf32>
    %cst_18 = arith.constant 1.000000e+00 : f32
    %32 = vector.broadcast %cst_18 : f32 to vector<16x128xf32>
    %33 = arith.addf %32, %31 : vector<16x128xf32>
    %34 = arith.divf %32, %33 : vector<16x128xf32>
    %35 = vector.extract_strided_slice %28 {offsets = [0, 128], sizes = [16, 128], strides = [1, 1]} : vector<16x256xf32> to vector<16x128xf32>
    %36 = arith.mulf %34, %35 : vector<16x128xf32>
    %cst_19 = arith.constant 0.000000e+00 : f32
    %37 = vector.broadcast %cst_19 : f32 to vector<16x128xf32>
    %38 = arith.maximumf %36, %37 : vector<16x128xf32>
    %cst_20 = arith.constant dense<0.000000e+00> : vector<16x128xf32>
    %39 = tpu.matmul %38, %4, %cst_20 {dimension_numbers = #tpu.dot_dimension_numbers<[1], [0], [0], [1], [0, 0, 1, 1], [], []>} : vector<16x128xf32>, vector<128x128xf32>, vector<16x128xf32> -> vector<16x128xf32>
    %40 = arith.addf %39, %23 : vector<16x128xf32>
    %cst_21 = arith.constant 0.000000e+00 : f32
    %41 = vector.broadcast %cst_21 : f32 to vector<16x128xf32>
    %42 = arith.cmpf oge, %40, %41 : vector<16x128xf32>
    %cst_22 = arith.constant 0.00999999977 : f32
    %43 = vector.broadcast %cst_22 : f32 to vector<16x128xf32>
    %44 = arith.mulf %43, %40 : vector<16x128xf32>
    %45 = arith.select %42, %40, %44 : vector<16x128xi1>, vector<16x128xf32>
    %46 = vector.extract_strided_slice %2 {offsets = [0, 512], sizes = [16, 512], strides = [1, 1]} : vector<16x1024xf32> to vector<16x512xf32>
    %c0_23 = arith.constant 0 : index
    %c0_24 = arith.constant 0 : index
    %47 = vector.load %arg9[%c0_23, %c0_24] : memref<1x512xf32, #tpu.memory_space<vmem>>, vector<1x512xf32>
    %c0_25 = arith.constant 0 : index
    %c0_26 = arith.constant 0 : index
    %48 = vector.load %arg11[%c0_25, %c0_26] : memref<1x256xf32, #tpu.memory_space<vmem>>, vector<1x256xf32>
    %49 = arith.truncf %45 : vector<16x128xf32> to vector<16x128xbf16>
    %c0_27 = arith.constant 0 : index
    %c0_28 = arith.constant 0 : index
    %50 = vector.load %arg8[%c0_27, %c0_28] : memref<128x512xbf16, #tpu.memory_space<vmem>>, vector<128x512xbf16>
    %cst_29 = arith.constant dense<0.000000e+00> : vector<16x512xf32>
    %51 = tpu.matmul %49, %50, %cst_29 {dimension_numbers = #tpu.dot_dimension_numbers<[1], [0], [0], [1], [0, 0, 1, 1], [], []>} : vector<16x128xbf16>, vector<128x512xbf16>, vector<16x512xf32> -> vector<16x512xf32>
    %52 = arith.addf %51, %46 : vector<16x512xf32>
    %53 = vector.broadcast %47 : vector<1x512xf32> to vector<16x512xf32>
    %54 = arith.addf %52, %53 : vector<16x512xf32>
    %55 = vector.extract_strided_slice %54 {offsets = [0, 0], sizes = [16, 256], strides = [1, 1]} : vector<16x512xf32> to vector<16x256xf32>
    %56 = arith.negf %55 : vector<16x256xf32>
    %57 = math.exp %56 : vector<16x256xf32>
    %cst_30 = arith.constant 1.000000e+00 : f32
    %58 = vector.broadcast %cst_30 : f32 to vector<16x256xf32>
    %59 = arith.addf %58, %57 : vector<16x256xf32>
    %60 = arith.divf %58, %59 : vector<16x256xf32>
    %61 = vector.extract_strided_slice %54 {offsets = [0, 256], sizes = [16, 256], strides = [1, 1]} : vector<16x512xf32> to vector<16x256xf32>
    %62 = arith.mulf %60, %61 : vector<16x256xf32>
    %cst_31 = arith.constant 0.000000e+00 : f32
    %63 = vector.broadcast %cst_31 : f32 to vector<16x256xf32>
    %64 = arith.maximumf %62, %63 : vector<16x256xf32>
    %65 = vector.extract_strided_slice %64 {offsets = [0, 0], sizes = [16, 128], strides = [1, 1]} : vector<16x256xf32> to vector<16x128xf32>
    %cst_32 = arith.constant dense<0.000000e+00> : vector<16x128xf32>
    %66 = tpu.matmul %65, %3, %cst_32 {dimension_numbers = #tpu.dot_dimension_numbers<[1], [0], [0], [1], [0, 0, 1, 1], [], []>} : vector<16x128xf32>, vector<128x128xf32>, vector<16x128xf32> -> vector<16x128xf32>
    %67 = vector.extract_strided_slice %64 {offsets = [0, 128], sizes = [16, 128], strides = [1, 1]} : vector<16x256xf32> to vector<16x128xf32>
    %cst_33 = arith.constant dense<0.000000e+00> : vector<16x128xf32>
    %68 = tpu.matmul %67, %4, %cst_33 {dimension_numbers = #tpu.dot_dimension_numbers<[1], [0], [0], [1], [0, 0, 1, 1], [], []>} : vector<16x128xf32>, vector<128x128xf32>, vector<16x128xf32> -> vector<16x128xf32>
    %69 = arith.truncf %66 : vector<16x128xf32> to vector<16x128xbf16>
    %c0_34 = arith.constant 0 : index
    %c0_35 = arith.constant 0 : index
    %70 = vector.load %arg10[%c0_34, %c0_35] : memref<128x256xbf16, #tpu.memory_space<vmem>>, vector<128x256xbf16>
    %cst_36 = arith.constant dense<0.000000e+00> : vector<16x256xf32>
    %71 = tpu.matmul %69, %70, %cst_36 {dimension_numbers = #tpu.dot_dimension_numbers<[1], [0], [0], [1], [0, 0, 1, 1], [], []>} : vector<16x128xbf16>, vector<128x256xbf16>, vector<16x256xf32> -> vector<16x256xf32>
    %72 = vector.broadcast %48 : vector<1x256xf32> to vector<16x256xf32>
    %73 = arith.addf %71, %72 : vector<16x256xf32>
    %74 = vector.extract_strided_slice %73 {offsets = [0, 0], sizes = [16, 128], strides = [1, 1]} : vector<16x256xf32> to vector<16x128xf32>
    %75 = arith.negf %74 : vector<16x128xf32>
    %76 = math.exp %75 : vector<16x128xf32>
    %cst_37 = arith.constant 1.000000e+00 : f32
    %77 = vector.broadcast %cst_37 : f32 to vector<16x128xf32>
    %78 = arith.addf %77, %76 : vector<16x128xf32>
    %79 = arith.divf %77, %78 : vector<16x128xf32>
    %80 = vector.extract_strided_slice %73 {offsets = [0, 128], sizes = [16, 128], strides = [1, 1]} : vector<16x256xf32> to vector<16x128xf32>
    %81 = arith.mulf %79, %80 : vector<16x128xf32>
    %cst_38 = arith.constant 0.000000e+00 : f32
    %82 = vector.broadcast %cst_38 : f32 to vector<16x128xf32>
    %83 = arith.maximumf %81, %82 : vector<16x128xf32>
    %cst_39 = arith.constant dense<0.000000e+00> : vector<16x128xf32>
    %84 = tpu.matmul %83, %4, %cst_39 {dimension_numbers = #tpu.dot_dimension_numbers<[1], [0], [0], [1], [0, 0, 1, 1], [], []>} : vector<16x128xf32>, vector<128x128xf32>, vector<16x128xf32> -> vector<16x128xf32>
    %85 = arith.addf %84, %68 : vector<16x128xf32>
    %cst_40 = arith.constant 0.000000e+00 : f32
    %86 = vector.broadcast %cst_40 : f32 to vector<16x128xf32>
    %87 = arith.cmpf oge, %85, %86 : vector<16x128xf32>
    %cst_41 = arith.constant 0.00999999977 : f32
    %88 = vector.broadcast %cst_41 : f32 to vector<16x128xf32>
    %89 = arith.mulf %88, %85 : vector<16x128xf32>
    %90 = arith.select %87, %85, %89 : vector<16x128xi1>, vector<16x128xf32>
    %91 = arith.truncf %90 : vector<16x128xf32> to vector<16x128xbf16>
    %c0_42 = arith.constant 0 : index
    %c0_43 = arith.constant 0 : index
    %92 = vector.load %arg12[%c0_42, %c0_43] : memref<128x128xbf16, #tpu.memory_space<vmem>>, vector<128x128xbf16>
    %cst_44 = arith.constant dense<0.000000e+00> : vector<16x128xf32>
    %93 = tpu.matmul %91, %92, %cst_44 {dimension_numbers = #tpu.dot_dimension_numbers<[1], [0], [0], [1], [0, 0, 1, 1], [], []>} : vector<16x128xbf16>, vector<128x128xbf16>, vector<16x128xf32> -> vector<16x128xf32>
    %c0_45 = arith.constant 0 : index
    %c0_46 = arith.constant 0 : index
    %94 = vector.load %arg13[%c0_45, %c0_46] : memref<1x128xf32, #tpu.memory_space<vmem>>, vector<1x128xf32>
    %95 = vector.broadcast %94 : vector<1x128xf32> to vector<16x128xf32>
    %96 = arith.addf %93, %95 : vector<16x128xf32>
    %cst_47 = arith.constant 0.000000e+00 : f32
    %97 = vector.broadcast %cst_47 : f32 to vector<16x128xf32>
    %98 = arith.maximumf %96, %97 : vector<16x128xf32>
    %99 = arith.truncf %98 : vector<16x128xf32> to vector<16x128xbf16>
    %c0_48 = arith.constant 0 : index
    %c0_49 = arith.constant 0 : index
    %100 = vector.load %arg14[%c0_48, %c0_49] : memref<128x128xbf16, #tpu.memory_space<vmem>>, vector<128x128xbf16>
    %cst_50 = arith.constant dense<0.000000e+00> : vector<16x128xf32>
    %101 = tpu.matmul %99, %100, %cst_50 {dimension_numbers = #tpu.dot_dimension_numbers<[1], [0], [0], [1], [0, 0, 1, 1], [], []>} : vector<16x128xbf16>, vector<128x128xbf16>, vector<16x128xf32> -> vector<16x128xf32>
    %c0_51 = arith.constant 0 : index
    %c0_52 = arith.constant 0 : index
    %102 = vector.load %arg15[%c0_51, %c0_52] : memref<1x128xf32, #tpu.memory_space<vmem>>, vector<1x128xf32>
    %103 = vector.broadcast %102 : vector<1x128xf32> to vector<16x128xf32>
    %104 = arith.addf %101, %103 : vector<16x128xf32>
    %105 = arith.truncf %104 : vector<16x128xf32> to vector<16x128xbf16>
    %c0_53 = arith.constant 0 : index
    %c0_54 = arith.constant 0 : index
    %106 = vector.load %arg16[%c0_53, %c0_54] : memref<16x128xbf16, #tpu.memory_space<vmem>>, vector<16x128xbf16>
    tpu.vector_store %arg16[%c0_53, %c0_54], %105 {strides = array<i32>} : memref<16x128xbf16, #tpu.memory_space<vmem>>, vector<16x128xbf16>,
    return
  }
  func.func @transform_0(%arg0: i32) -> (i32, i32) {
    %c0_i32 = arith.constant 0 : i32
    %c0_i32_0 = arith.constant 0 : i32
    return %arg0, %c0_i32 : i32, i32
  }
  func.func @transform_1(%arg0: i32) -> (i32, i32) {
    %c0_i32 = arith.constant 0 : i32
    %c0_i32_0 = arith.constant 0 : i32
    %c0_i32_1 = arith.constant 0 : i32
    return %c0_i32, %c0_i32_0 : i32, i32
  }
  func.func @transform_2(%arg0: i32) -> (i32, i32) {
    %c0_i32 = arith.constant 0 : i32
    %c0_i32_0 = arith.constant 0 : i32
    %c0_i32_1 = arith.constant 0 : i32
    return %c0_i32, %c0_i32_0 : i32, i32
  }
  func.func @transform_3(%arg0: i32) -> (i32, i32) {
    %c0_i32 = arith.constant 0 : i32
    %c0_i32_0 = arith.constant 0 : i32
    %c0_i32_1 = arith.constant 0 : i32
    return %c0_i32, %c0_i32_0 : i32, i32
  }
  func.func @transform_4(%arg0: i32) -> (i32, i32) {
    %c0_i32 = arith.constant 0 : i32
    %c0_i32_0 = arith.constant 0 : i32
    %c0_i32_1 = arith.constant 0 : i32
    return %c0_i32, %c0_i32_0 : i32, i32
  }
  func.func @transform_5(%arg0: i32) -> (i32, i32) {
    %c0_i32 = arith.constant 0 : i32
    %c0_i32_0 = arith.constant 0 : i32
    %c0_i32_1 = arith.constant 0 : i32
    return %c0_i32, %c0_i32_0 : i32, i32
  }
  func.func @transform_6(%arg0: i32) -> (i32, i32) {
    %c0_i32 = arith.constant 0 : i32
    %c0_i32_0 = arith.constant 0 : i32
    %c0_i32_1 = arith.constant 0 : i32
    return %c0_i32, %c0_i32_0 : i32, i32
  }
  func.func @transform_7(%arg0: i32) -> (i32, i32) {
    %c0_i32 = arith.constant 0 : i32
    %c0_i32_0 = arith.constant 0 : i32
    %c0_i32_1 = arith.constant 0 : i32
    return %c0_i32, %c0_i32_0 : i32, i32
  }
  func.func @transform_8(%arg0: i32) -> (i32, i32) {
    %c0_i32 = arith.constant 0 : i32
    %c0_i32_0 = arith.constant 0 : i32
    %c0_i32_1 = arith.constant 0 : i32
    return %c0_i32, %c0_i32_0 : i32, i32
  }
  func.func @transform_9(%arg0: i32) -> (i32, i32) {
    %c0_i32 = arith.constant 0 : i32
    %c0_i32_0 = arith.constant 0 : i32
    %c0_i32_1 = arith.constant 0 : i32
    return %c0_i32, %c0_i32_0 : i32, i32
  }
  func.func @transform_10(%arg0: i32) -> (i32, i32) {
    %c0_i32 = arith.constant 0 : i32
    %c0_i32_0 = arith.constant 0 : i32
    %c0_i32_1 = arith.constant 0 : i32
    return %c0_i32, %c0_i32_0 : i32, i32
  }
  func.func @transform_11(%arg0: i32) -> (i32, i32) {
    %c0_i32 = arith.constant 0 : i32
    %c0_i32_0 = arith.constant 0 : i32
    %c0_i32_1 = arith.constant 0 : i32
    return %c0_i32, %c0_i32_0 : i32, i32
  }
  func.func @transform_12(%arg0: i32) -> (i32, i32) {
    %c0_i32 = arith.constant 0 : i32
    %c0_i32_0 = arith.constant 0 : i32
    %c0_i32_1 = arith.constant 0 : i32
    return %c0_i32, %c0_i32_0 : i32, i32
  }
  func.func @transform_13(%arg0: i32) -> (i32, i32) {
    %c0_i32 = arith.constant 0 : i32
    %c0_i32_0 = arith.constant 0 : i32
    %c0_i32_1 = arith.constant 0 : i32
    return %c0_i32, %c0_i32_0 : i32, i32
  }
  func.func @transform_14(%arg0: i32) -> (i32, i32) {
    %c0_i32 = arith.constant 0 : i32
    %c0_i32_0 = arith.constant 0 : i32
    %c0_i32_1 = arith.constant 0 : i32
    return %c0_i32, %c0_i32_0 : i32, i32
  }
  func.func @transform_15(%arg0: i32) -> (i32, i32) {
    %c0_i32 = arith.constant 0 : i32
    %c0_i32_0 = arith.constant 0 : i32
    return %arg0, %c0_i32 : i32, i32
  }
}

</mosaic_0001>

<llo_original>
// kernel: tpu_custom_call.1
$region0: #{tpu_custom_call.1}
  #allocation0 [shape = 'u32[]', space=smem, size = 0x4, offset = 0x4, fixed_abs, tag = 'smem constant byte address 0x4 - core index']
  #allocation1 [shape = 'u32[144,128]{1,0:T(1,128)}', space=vmem, size = 0x12000, scoped, tag = 'internal scratch']
  %s0 = inlined_call_operand.hbm [shape: bf16[16,16], index: 0, kind: input, shape index: {}]
  %s1 = inlined_call_operand.hbm [shape: bf16[16,1024], index: 1, kind: input, shape index: {}]
  %s2 = inlined_call_operand.hbm [shape: f32[128,128], index: 2, kind: input, shape index: {}]
  %s3 = inlined_call_operand.hbm [shape: f32[128,128], index: 3, kind: input, shape index: {}]
  %s4 = inlined_call_operand.vmem [shape: f32[1,512], index: 4, kind: input, shape index: {}]
  %s5 = inlined_call_operand.hbm [shape: bf16[128,256], index: 5, kind: input, shape index: {}]
  %s6 = inlined_call_operand.vmem [shape: f32[1,256], index: 6, kind: input, shape index: {}]
  %s7 = inlined_call_operand.hbm [shape: bf16[128,512], index: 7, kind: input, shape index: {}]
  %s8 = inlined_call_operand.vmem [shape: f32[1,512], index: 8, kind: input, shape index: {}]
  %s9 = inlined_call_operand.hbm [shape: bf16[128,256], index: 9, kind: input, shape index: {}]
  %s10 = inlined_call_operand.vmem [shape: f32[1,256], index: 10, kind: input, shape index: {}]
  %s11 = inlined_call_operand.hbm [shape: bf16[128,128], index: 11, kind: input, shape index: {}]
  %s12 = inlined_call_operand.vmem [shape: f32[1,128], index: 12, kind: input, shape index: {}]
  %s13 = inlined_call_operand.hbm [shape: bf16[128,128], index: 13, kind: input, shape index: {}]
  %s14 = inlined_call_operand.vmem [shape: f32[1,128], index: 14, kind: input, shape index: {}]
  %s15 = inlined_call_operand.hbm [shape: bf16[16,128], index: 15, kind: output, shape index: {}]
  %s16 = sld [smem:[#allocation0]]
  $region106: #{tpu_custom_call.1} parent=0
    _
  %s18 = ssub.s32 1, %s16
  %s19 = scalar_select 0, %s18, %s16
  $region1: #{tpu_custom_call.1} parent=0
    #allocation2 [shape = 'u8[4096]{0}', space=vmem, size = 0x1000, scoped, tag = 'input window, operand 0, single buffered']
    #allocation3 [shape = 's32[1]{0}', space=sflag, size = 0x4, scoped, tag = 'scoped memory for tpu_custom_call.1']
    #allocation4 [shape = 's32[1]{0}', space=sflag, size = 0x4, scoped, tag = 'scoped memory for tpu_custom_call.1']
    #allocation5 [shape = 'u8[32768]{0}', space=vmem, size = 0x8000, scoped, tag = 'input window, operand 1, single buffered']
    #allocation6 [shape = 's32[1]{0}', space=sflag, size = 0x4, scoped, tag = 'scoped memory for tpu_custom_call.1']
    #allocation7 [shape = 'u8[65536]{0}', space=vmem, size = 0x10000, scoped, tag = 'input window, operand 2, single buffered']
    #allocation8 [shape = 'u8[65536]{0}', space=vmem, size = 0x10000, scoped, tag = 'input window, operand 3, single buffered']
    #allocation9 [shape = 's32[1]{0}', space=sflag, size = 0x4, scoped, tag = 'scoped memory for tpu_custom_call.1']
    #allocation10 [shape = 'u8[65536]{0}', space=vmem, size = 0x10000, scoped, tag = 'input window, operand 5, single buffered']
    #allocation11 [shape = 'u8[131072]{0}', space=vmem, size = 0x20000, scoped, tag = 'input window, operand 7, single buffered']
    #allocation12 [shape = 's32[1]{0}', space=sflag, size = 0x4, scoped, tag = 'scoped memory for tpu_custom_call.1']
    #allocation13 [shape = 'u8[65536]{0}', space=vmem, size = 0x10000, scoped, tag = 'input window, operand 9, single buffered']
    #allocation14 [shape = 'u8[32768]{0}', space=vmem, size = 0x8000, scoped, tag = 'input window, operand 11, single buffered']
    #allocation15 [shape = 's32[1]{0}', space=sflag, size = 0x4, scoped, tag = 'scoped memory for tpu_custom_call.1']
    #allocation16 [shape = 'u8[32768]{0}', space=vmem, size = 0x8000, scoped, tag = 'input window, operand 13, single buffered']
    #allocation17 [shape = 'u8[4096]{0}', space=vmem, size = 0x1000, scoped, tag = 'output window, operand 0, single buffered']
    %20 = vsyncpa [#allocation3], 0
    %21 = vsyncpa [#allocation6], 0
    %22 = vsyncpa [#allocation9], 0
    %23 = vsyncpa [#allocation12], 0
    %24 = vsyncpa [#allocation15], 0
    %25 = vsyncpa [#allocation4], 0
    // Predicated region
    $region2: #{tpu_custom_call.1} parent=1 // pred_check
      _
    $region3: #{tpu_custom_call.1} parent=1 // pred_check_branch
      %27 = sbr.rel (0) target = $region5
    $region4: #{tpu_custom_call.1} parent=1 // pred_region
      %s29 = ssub.s32 128, 128
      %30 = vsyncadd [#allocation3], %s29
      %s31 = sshll.u32 [#allocation2], 4
      %s32 = int_to_ptr.vmem [resolvable:$true] %s31
      %37 = dma.hbm_to_vmem [thread:$0]  %s0, 128, %s32, [#allocation3], 64, 64, 4
    $region5: #{tpu_custom_call.1} parent=1 // pred_fallthru
      _
    // Predicated region
    $region6: #{tpu_custom_call.1} parent=1 // pred_check
      _
    $region7: #{tpu_custom_call.1} parent=1 // pred_check_branch
      %39 = sbr.rel (0) target = $region9
    $region8: #{tpu_custom_call.1} parent=1 // pred_region
      %s41 = ssub.s32 1024, 1024
      %42 = vsyncadd [#allocation6], %s41
      %s43 = sshll.u32 [#allocation5], 4
      %s44 = int_to_ptr.vmem [resolvable:$true] %s43
      %49 = dma.hbm_to_vmem [thread:$0]  %s1, 1024, %s44, [#allocation6], 512, 512, 32
    $region9: #{tpu_custom_call.1} parent=1 // pred_fallthru
      _
    // Predicated region
    $region10: #{tpu_custom_call.1} parent=1 // pred_check
      _
    $region11: #{tpu_custom_call.1} parent=1 // pred_check_branch
      %51 = sbr.rel (0) target = $region13
    $region12: #{tpu_custom_call.1} parent=1 // pred_region
      %s53 = ssub.s32 2048, 2048
      %54 = vsyncadd [#allocation6], %s53
      %s55 = sshll.u32 [#allocation7], 4
      %s56 = int_to_ptr.vmem [resolvable:$true] %s55
      %61 = dma.hbm_to_vmem [thread:$0]  %s2, 2048, %s56, [#allocation6], 128, 128, 8
    $region13: #{tpu_custom_call.1} parent=1 // pred_fallthru
      _
    // Predicated region
    $region14: #{tpu_custom_call.1} parent=1 // pred_check
      _
    $region15: #{tpu_custom_call.1} parent=1 // pred_check_branch
      %63 = sbr.rel (0) target = $region17
    $region16: #{tpu_custom_call.1} parent=1 // pred_region
      %s65 = ssub.s32 2048, 2048
      %66 = vsyncadd [#allocation9], %s65
      %s67 = sshll.u32 [#allocation8], 4
      %s68 = int_to_ptr.vmem [resolvable:$true] %s67
      %73 = dma.hbm_to_vmem [thread:$0]  %s3, 2048, %s68, [#allocation9], 128, 128, 8
    $region17: #{tpu_custom_call.1} parent=1 // pred_fallthru
      _
    // Predicated region
    $region18: #{tpu_custom_call.1} parent=1 // pred_check
      _
    $region19: #{tpu_custom_call.1} parent=1 // pred_check_branch
      %75 = sbr.rel (0) target = $region21
    $region20: #{tpu_custom_call.1} parent=1 // pred_region
      _
    $region21: #{tpu_custom_call.1} parent=1 // pred_fallthru
      _
    // Predicated region
    $region22: #{tpu_custom_call.1} parent=1 // pred_check
      _
    $region23: #{tpu_custom_call.1} parent=1 // pred_check_branch
      %77 = sbr.rel (0) target = $region25
    $region24: #{tpu_custom_call.1} parent=1 // pred_region
      %s79 = ssub.s32 2048, 2048
      %80 = vsyncadd [#allocation9], %s79
      %s81 = sshll.u32 [#allocation10], 4
      %s82 = int_to_ptr.vmem [resolvable:$true] %s81
      %87 = dma.hbm_to_vmem [thread:$0]  %s5, 2048, %s82, [#allocation9], 128, 128, 8
    $region25: #{tpu_custom_call.1} parent=1 // pred_fallthru
      _
    // Predicated region
    $region26: #{tpu_custom_call.1} parent=1 // pred_check
      _
    $region27: #{tpu_custom_call.1} parent=1 // pred_check_branch
      %89 = sbr.rel (0) target = $region29
    $region28: #{tpu_custom_call.1} parent=1 // pred_region
      _
    $region29: #{tpu_custom_call.1} parent=1 // pred_fallthru
      _
    // Predicated region
    $region30: #{tpu_custom_call.1} parent=1 // pred_check
      _
    $region31: #{tpu_custom_call.1} parent=1 // pred_check_branch
      %91 = sbr.rel (0) target = $region33
    $region32: #{tpu_custom_call.1} parent=1 // pred_region
      %s93 = ssub.s32 4096, 4096
      %94 = vsyncadd [#allocation12], %s93
      %s95 = sshll.u32 [#allocation11], 4
      %s96 = int_to_ptr.vmem [resolvable:$true] %s95
      %101 = dma.hbm_to_vmem [thread:$0]  %s7, 4096, %s96, [#allocation12], 256, 256, 16
    $region33: #{tpu_custom_call.1} parent=1 // pred_fallthru
      _
    // Predicated region
    $region34: #{tpu_custom_call.1} parent=1 // pred_check
      _
    $region35: #{tpu_custom_call.1} parent=1 // pred_check_branch
      %103 = sbr.rel (0) target = $region37
    $region36: #{tpu_custom_call.1} parent=1 // pred_region
      _
    $region37: #{tpu_custom_call.1} parent=1 // pred_fallthru
      _
    // Predicated region
    $region38: #{tpu_custom_call.1} parent=1 // pred_check
      _
    $region39: #{tpu_custom_call.1} parent=1 // pred_check_branch
      %105 = sbr.rel (0) target = $region41
    $region40: #{tpu_custom_call.1} parent=1 // pred_region
      %s107 = ssub.s32 2048, 2048
      %108 = vsyncadd [#allocation12], %s107
      %s109 = sshll.u32 [#allocation13], 4
      %s110 = int_to_ptr.vmem [resolvable:$true] %s109
      %115 = dma.hbm_to_vmem [thread:$0]  %s9, 2048, %s110, [#allocation12], 128, 128, 8
    $region41: #{tpu_custom_call.1} parent=1 // pred_fallthru
      _
    // Predicated region
    $region42: #{tpu_custom_call.1} parent=1 // pred_check
      _
    $region43: #{tpu_custom_call.1} parent=1 // pred_check_branch
      %117 = sbr.rel (0) target = $region45
    $region44: #{tpu_custom_call.1} parent=1 // pred_region
      _
    $region45: #{tpu_custom_call.1} parent=1 // pred_fallthru
      _
    // Predicated region
    $region46: #{tpu_custom_call.1} parent=1 // pred_check
      _
    $region47: #{tpu_custom_call.1} parent=1 // pred_check_branch
      %119 = sbr.rel (0) target = $region49
    $region48: #{tpu_custom_call.1} parent=1 // pred_region
      %s121 = ssub.s32 1024, 1024
      %122 = vsyncadd [#allocation15], %s121
      %s123 = sshll.u32 [#allocation14], 4
      %s124 = int_to_ptr.vmem [resolvable:$true] %s123
      %129 = dma.hbm_to_vmem [thread:$0]  %s11, 1024, %s124, [#allocation15], 64, 64, 4
    $region49: #{tpu_custom_call.1} parent=1 // pred_fallthru
      _
    // Predicated region
    $region50: #{tpu_custom_call.1} parent=1 // pred_check
      _
    $region51: #{tpu_custom_call.1} parent=1 // pred_check_branch
      %131 = sbr.rel (0) target = $region53
    $region52: #{tpu_custom_call.1} parent=1 // pred_region
      _
    $region53: #{tpu_custom_call.1} parent=1 // pred_fallthru
      _
    // Predicated region
    $region54: #{tpu_custom_call.1} parent=1 // pred_check
      _
    $region55: #{tpu_custom_call.1} parent=1 // pred_check_branch
      %133 = sbr.rel (0) target = $region57
    $region56: #{tpu_custom_call.1} parent=1 // pred_region
      %s135 = ssub.s32 1024, 1024
      %136 = vsyncadd [#allocation15], %s135
      %s137 = sshll.u32 [#allocation16], 4
      %s138 = int_to_ptr.vmem [resolvable:$true] %s137
      %143 = dma.hbm_to_vmem [thread:$0]  %s13, 1024, %s138, [#allocation15], 64, 64, 4
    $region57: #{tpu_custom_call.1} parent=1 // pred_fallthru
      _
    // Predicated region
    $region58: #{tpu_custom_call.1} parent=1 // pred_check
      _
    $region59: #{tpu_custom_call.1} parent=1 // pred_check_branch
      %145 = sbr.rel (0) target = $region61
    $region60: #{tpu_custom_call.1} parent=1 // pred_region
      _
    $region61: #{tpu_custom_call.1} parent=1 // pred_fallthru
      _
    // Predicated region
    $region62: #{tpu_custom_call.1} parent=1 // pred_check
      _
    $region63: #{tpu_custom_call.1} parent=1 // pred_check_branch
      %147 = sbr.rel (0) target = $region65
    $region64: #{tpu_custom_call.1} parent=1 // pred_region
      %148 = dma.done [#allocation3], 128
    $region65: #{tpu_custom_call.1} parent=1 // pred_fallthru
      _
    // Predicated region
    $region66: #{tpu_custom_call.1} parent=1 // pred_check
      _
    $region67: #{tpu_custom_call.1} parent=1 // pred_check_branch
      %150 = sbr.rel (0) target = $region69
    $region68: #{tpu_custom_call.1} parent=1 // pred_region
      %151 = dma.done [#allocation6], 1024
    $region69: #{tpu_custom_call.1} parent=1 // pred_fallthru
      _
    // Predicated region
    $region70: #{tpu_custom_call.1} parent=1 // pred_check
      _
    $region71: #{tpu_custom_call.1} parent=1 // pred_check_branch
      %153 = sbr.rel (0) target = $region73
    $region72: #{tpu_custom_call.1} parent=1 // pred_region
      %154 = dma.done [#allocation6], 2048
    $region73: #{tpu_custom_call.1} parent=1 // pred_fallthru
      _
    // Predicated region
    $region74: #{tpu_custom_call.1} parent=1 // pred_check
      _
    $region75: #{tpu_custom_call.1} parent=1 // pred_check_branch
      %156 = sbr.rel (0) target = $region77
    $region76: #{tpu_custom_call.1} parent=1 // pred_region
      %157 = dma.done [#allocation9], 2048
    $region77: #{tpu_custom_call.1} parent=1 // pred_fallthru
      _
    // Predicated region
    $region78: #{tpu_custom_call.1} parent=1 // pred_check
      _
    $region79: #{tpu_custom_call.1} parent=1 // pred_check_branch
      %159 = sbr.rel (0) target = $region81
    $region80: #{tpu_custom_call.1} parent=1 // pred_region
      %160 = dma.done [#allocation9], 2048
    $region81: #{tpu_custom_call.1} parent=1 // pred_fallthru
      _
    // Predicated region
    $region82: #{tpu_custom_call.1} parent=1 // pred_check
      _
    $region83: #{tpu_custom_call.1} parent=1 // pred_check_branch
      %162 = sbr.rel (0) target = $region85
    $region84: #{tpu_custom_call.1} parent=1 // pred_region
      %163 = dma.done [#allocation12], 4096
    $region85: #{tpu_custom_call.1} parent=1 // pred_fallthru
      _
    // Predicated region
    $region86: #{tpu_custom_call.1} parent=1 // pred_check
      _
    $region87: #{tpu_custom_call.1} parent=1 // pred_check_branch
      %165 = sbr.rel (0) target = $region89
    $region88: #{tpu_custom_call.1} parent=1 // pred_region
      %166 = dma.done [#allocation12], 2048
    $region89: #{tpu_custom_call.1} parent=1 // pred_fallthru
      _
    // Predicated region
    $region90: #{tpu_custom_call.1} parent=1 // pred_check
      _
    $region91: #{tpu_custom_call.1} parent=1 // pred_check_branch
      %168 = sbr.rel (0) target = $region93
    $region92: #{tpu_custom_call.1} parent=1 // pred_region
      %169 = dma.done [#allocation15], 1024
    $region93: #{tpu_custom_call.1} parent=1 // pred_fallthru
      _
    // Predicated region
    $region94: #{tpu_custom_call.1} parent=1 // pred_check
      _
    $region95: #{tpu_custom_call.1} parent=1 // pred_check_branch
      %171 = sbr.rel (0) target = $region97
    $region96: #{tpu_custom_call.1} parent=1 // pred_region
      %172 = dma.done [#allocation15], 1024
    $region97: #{tpu_custom_call.1} parent=1 // pred_fallthru
      _
    %v174 = vld [vmem:[#allocation2] sm:$0xf]
    %v175 = vld [vmem:[#allocation2 + $0x4] sm:$0xf]
    %v176 = vld [vmem:[#allocation5] sm:$0xff]
    %v177 = vld [vmem:[#allocation5 + $0x8] sm:$0xff]
    %v178 = vld [vmem:[#allocation5 + $0x10] sm:$0xff]
    %v179 = vld [vmem:[#allocation5 + $0x18] sm:$0xff]
    %v180 = vld [vmem:[#allocation5 + $0x20] sm:$0xff]
    %v181 = vld [vmem:[#allocation5 + $0x28] sm:$0xff]
    %v182 = vld [vmem:[#allocation5 + $0x30] sm:$0xff]
    %v183 = vld [vmem:[#allocation5 + $0x38] sm:$0xff]
    %v186 = vunpack.c.l.b16 %v174
    %v187 = vunpack.c.l.b16 %v175
    %v188 = vpack.c.b16 %v187, %v186
    %v197 = vunpack.c.l.b16 %v176
    %v198 = vunpack.c.h.b16 %v176
    %v199 = vunpack.c.l.b16 %v177
    %v200 = vunpack.c.h.b16 %v177
    %v201 = vunpack.c.l.b16 %v178
    %v202 = vunpack.c.h.b16 %v178
    %v203 = vunpack.c.l.b16 %v179
    %v204 = vunpack.c.h.b16 %v179
    %v205 = vunpack.c.l.b16 %v180
    %v206 = vunpack.c.h.b16 %v180
    %v207 = vunpack.c.l.b16 %v181
    %v208 = vunpack.c.h.b16 %v181
    %v209 = vunpack.c.l.b16 %v182
    %v210 = vunpack.c.h.b16 %v182
    %v211 = vunpack.c.l.b16 %v183
    %v212 = vunpack.c.h.b16 %v183
    %v213 = vpack.c.b16 %v205, %v197
    %v214 = vpack.c.b16 %v206, %v198
    %v215 = vpack.c.b16 %v207, %v199
    %v216 = vpack.c.b16 %v208, %v200
    %v217 = vpack.c.b16 %v209, %v201
    %v218 = vpack.c.b16 %v210, %v202
    %v219 = vpack.c.b16 %v211, %v203
    %v220 = vpack.c.b16 %v212, %v204
    %vm229 = vcmask 130048
    %v231 = vsel %vm229, %v188, 0
    %233 = vmatprep.subr.bf16.mxu0 %v214
    %234 = vmatpush1.bf16.msra.mxu0 %v213
    %235 = vmatprep.subr.bf16.mxu0 0
    %236 = vmatpush1.bf16.msra.mxu0 0
    %237 = vmatprep.subr.bf16.mxu0 0
    %238 = vmatpush1.bf16.msra.mxu0 0
    %239 = vmatprep.subr.bf16.mxu0 0
    %240 = vmatpush1.bf16.msra.mxu0 0
    %241 = vmatprep.subr.bf16.mxu0 0
    %242 = vmatpush1.bf16.msra.mxu0 0
    %243 = vmatprep.subr.bf16.mxu0 0
    %244 = vmatpush1.bf16.msra.mxu0 0
    %245 = vmatprep.subr.bf16.mxu0 0
    %246 = vmatpush1.bf16.msra.mxu0 0
    %247 = vmatprep.subr.bf16.mxu0 0
    %248 = vmatpush1.bf16.msra.mxu0 0
    %249 = vmatprep.subr.bf16.mxu0 0
    %250 = vmatpush1.bf16.msra.mxu0 0
    %251 = vmatprep.subr.bf16.mxu0 0
    %252 = vmatpush1.bf16.msra.mxu0 0
    %253 = vmatprep.subr.bf16.mxu0 0
    %254 = vmatpush1.bf16.msra.mxu0 0
    %255 = vmatprep.subr.bf16.mxu0 0
    %256 = vmatpush1.bf16.msra.mxu0 0
    %257 = vmatprep.subr.bf16.mxu0 0
    %258 = vmatpush1.bf16.msra.mxu0 0
    %259 = vmatprep.subr.bf16.mxu0 0
    %260 = vmatpush1.bf16.msra.mxu0 0
    %261 = vmatprep.subr.bf16.mxu0 0
    %262 = vmatpush1.bf16.msra.mxu0 0
    %263 = vmatprep.subr.bf16.mxu0 0
    %264 = vmatpush1.bf16.msra.mxu0 0
    %265 = vmatprep.mubr.bf16.mxu0 0
    %266 = vmatmul.mubr.bf16.gmra.mrb[0].mxu0 %v231
    %v267 = vpop.f32.mrb[0].mxu0
    %v268 = vadd.f32 0.0, %v267
    %v269 = vpop.f32.mrb[0].mxu0
    %v270 = vadd.f32 0.0, %v269
    %v271 = vpop.f32.mrb[0].mxu0
    %v272 = vadd.f32 0.0, %v271
    %v273 = vpop.f32.mrb[0].mxu0
    %v274 = vadd.f32 0.0, %v273
    %275 = vdwg.mxu0
    %276 = vmatprep.subr.bf16.mxu0 %v216
    %277 = vmatpush1.bf16.msra.mxu0 %v215
    %278 = vmatprep.subr.bf16.mxu0 0
    %279 = vmatpush1.bf16.msra.mxu0 0
    %280 = vmatprep.subr.bf16.mxu0 0
    %281 = vmatpush1.bf16.msra.mxu0 0
    %282 = vmatprep.subr.bf16.mxu0 0
    %283 = vmatpush1.bf16.msra.mxu0 0
    %284 = vmatprep.subr.bf16.mxu0 0
    %285 = vmatpush1.bf16.msra.mxu0 0
    %286 = vmatprep.subr.bf16.mxu0 0
    %287 = vmatpush1.bf16.msra.mxu0 0
    %288 = vmatprep.subr.bf16.mxu0 0
    %289 = vmatpush1.bf16.msra.mxu0 0
    %290 = vmatprep.subr.bf16.mxu0 0
    %291 = vmatpush1.bf16.msra.mxu0 0
    %292 = vmatprep.subr.bf16.mxu0 0
    %293 = vmatpush1.bf16.msra.mxu0 0
    %294 = vmatprep.subr.bf16.mxu0 0
    %295 = vmatpush1.bf16.msra.mxu0 0
    %296 = vmatprep.subr.bf16.mxu0 0
    %297 = vmatpush1.bf16.msra.mxu0 0
    %298 = vmatprep.subr.bf16.mxu0 0
    %299 = vmatpush1.bf16.msra.mxu0 0
    %300 = vmatprep.subr.bf16.mxu0 0
    %301 = vmatpush1.bf16.msra.mxu0 0
    %302 = vmatprep.subr.bf16.mxu0 0
    %303 = vmatpush1.bf16.msra.mxu0 0
    %304 = vmatprep.subr.bf16.mxu0 0
    %305 = vmatpush1.bf16.msra.mxu0 0
    %306 = vmatprep.subr.bf16.mxu0 0
    %307 = vmatpush1.bf16.msra.mxu0 0
    %308 = vmatprep.mubr.bf16.mxu0 0
    %309 = vmatmul.mubr.bf16.gmra.mrb[0].mxu0 %v231
    %v310 = vpop.f32.mrb[0].mxu0
    %v311 = vadd.f32 0.0, %v310
    %v312 = vpop.f32.mrb[0].mxu0
    %v313 = vadd.f32 0.0, %v312
    %v314 = vpop.f32.mrb[0].mxu0
    %v315 = vadd.f32 0.0, %v314
    %v316 = vpop.f32.mrb[0].mxu0
    %v317 = vadd.f32 0.0, %v316
    %318 = vdwg.mxu0
    %319 = vmatprep.subr.bf16.mxu0 %v218
    %320 = vmatpush1.bf16.msra.mxu0 %v217
    %321 = vmatprep.subr.bf16.mxu0 0
    %322 = vmatpush1.bf16.msra.mxu0 0
    %323 = vmatprep.subr.bf16.mxu0 0
    %324 = vmatpush1.bf16.msra.mxu0 0
    %325 = vmatprep.subr.bf16.mxu0 0
    %326 = vmatpush1.bf16.msra.mxu0 0
    %327 = vmatprep.subr.bf16.mxu0 0
    %328 = vmatpush1.bf16.msra.mxu0 0
    %329 = vmatprep.subr.bf16.mxu0 0
    %330 = vmatpush1.bf16.msra.mxu0 0
    %331 = vmatprep.subr.bf16.mxu0 0
    %332 = vmatpush1.bf16.msra.mxu0 0
    %333 = vmatprep.subr.bf16.mxu0 0
    %334 = vmatpush1.bf16.msra.mxu0 0
    %335 = vmatprep.subr.bf16.mxu0 0
    %336 = vmatpush1.bf16.msra.mxu0 0
    %337 = vmatprep.subr.bf16.mxu0 0
    %338 = vmatpush1.bf16.msra.mxu0 0
    %339 = vmatprep.subr.bf16.mxu0 0
    %340 = vmatpush1.bf16.msra.mxu0 0
    %341 = vmatprep.subr.bf16.mxu0 0
    %342 = vmatpush1.bf16.msra.mxu0 0
    %343 = vmatprep.subr.bf16.mxu0 0
    %344 = vmatpush1.bf16.msra.mxu0 0
    %345 = vmatprep.subr.bf16.mxu0 0
    %346 = vmatpush1.bf16.msra.mxu0 0
    %347 = vmatprep.subr.bf16.mxu0 0
    %348 = vmatpush1.bf16.msra.mxu0 0
    %349 = vmatprep.subr.bf16.mxu0 0
    %350 = vmatpush1.bf16.msra.mxu0 0
    %351 = vmatprep.mubr.bf16.mxu0 0
    %352 = vmatmul.mubr.bf16.gmra.mrb[0].mxu0 %v231
    %v353 = vpop.f32.mrb[0].mxu0
    %v354 = vadd.f32 0.0, %v353
    %v355 = vpop.f32.mrb[0].mxu0
    %v356 = vadd.f32 0.0, %v355
    %v357 = vpop.f32.mrb[0].mxu0
    %v358 = vadd.f32 0.0, %v357
    %v359 = vpop.f32.mrb[0].mxu0
    %v360 = vadd.f32 0.0, %v359
    %361 = vdwg.mxu0
    %362 = vmatprep.subr.bf16.mxu0 %v220
    %363 = vmatpush1.bf16.msra.mxu0 %v219
    %364 = vmatprep.subr.bf16.mxu0 0
    %365 = vmatpush1.bf16.msra.mxu0 0
    %366 = vmatprep.subr.bf16.mxu0 0
    %367 = vmatpush1.bf16.msra.mxu0 0
    %368 = vmatprep.subr.bf16.mxu0 0
    %369 = vmatpush1.bf16.msra.mxu0 0
    %370 = vmatprep.subr.bf16.mxu0 0
    %371 = vmatpush1.bf16.msra.mxu0 0
    %372 = vmatprep.subr.bf16.mxu0 0
    %373 = vmatpush1.bf16.msra.mxu0 0
    %374 = vmatprep.subr.bf16.mxu0 0
    %375 = vmatpush1.bf16.msra.mxu0 0
    %376 = vmatprep.subr.bf16.mxu0 0
    %377 = vmatpush1.bf16.msra.mxu0 0
    %378 = vmatprep.subr.bf16.mxu0 0
    %379 = vmatpush1.bf16.msra.mxu0 0
    %380 = vmatprep.subr.bf16.mxu0 0
    %381 = vmatpush1.bf16.msra.mxu0 0
    %382 = vmatprep.subr.bf16.mxu0 0
    %383 = vmatpush1.bf16.msra.mxu0 0
    %384 = vmatprep.subr.bf16.mxu0 0
    %385 = vmatpush1.bf16.msra.mxu0 0
    %386 = vmatprep.subr.bf16.mxu0 0
    %387 = vmatpush1.bf16.msra.mxu0 0
    %388 = vmatprep.subr.bf16.mxu0 0
    %389 = vmatpush1.bf16.msra.mxu0 0
    %390 = vmatprep.subr.bf16.mxu0 0
    %391 = vmatpush1.bf16.msra.mxu0 0
    %392 = vmatprep.subr.bf16.mxu0 0
    %393 = vmatpush1.bf16.msra.mxu0 0
    %394 = vmatprep.mubr.bf16.mxu0 0
    %395 = vmatmul.mubr.bf16.gmra.mrb[0].mxu0 %v231
    %v396 = vpop.f32.mrb[0].mxu0
    %v397 = vadd.f32 0.0, %v396
    %v398 = vpop.f32.mrb[0].mxu0
    %v399 = vadd.f32 0.0, %v398
    %v400 = vpop.f32.mrb[0].mxu0
    %v401 = vadd.f32 0.0, %v400
    %v402 = vpop.f32.mrb[0].mxu0
    %v403 = vadd.f32 0.0, %v402
    %404 = vdwg.mxu0
    %v405 = vld [vmem:[#allocation7] sm:$0xff]
    %v406 = vld [vmem:[#allocation7 + $0x8] sm:$0xff]
    %v407 = vld [vmem:[#allocation7 + $0x10] sm:$0xff]
    %v408 = vld [vmem:[#allocation7 + $0x18] sm:$0xff]
    %v409 = vld [vmem:[#allocation7 + $0x20] sm:$0xff]
    %v410 = vld [vmem:[#allocation7 + $0x28] sm:$0xff]
    %v411 = vld [vmem:[#allocation7 + $0x30] sm:$0xff]
    %v412 = vld [vmem:[#allocation7 + $0x38] sm:$0xff]
    %v413 = vld [vmem:[#allocation7 + $0x40] sm:$0xff]
    %v414 = vld [vmem:[#allocation7 + $0x48] sm:$0xff]
    %v415 = vld [vmem:[#allocation7 + $0x50] sm:$0xff]
    %v416 = vld [vmem:[#allocation7 + $0x58] sm:$0xff]
    %v417 = vld [vmem:[#allocation7 + $0x60] sm:$0xff]
    %v418 = vld [vmem:[#allocation7 + $0x68] sm:$0xff]
    %v419 = vld [vmem:[#allocation7 + $0x70] sm:$0xff]
    %v420 = vld [vmem:[#allocation7 + $0x78] sm:$0xff]
    %v421 = vld [vmem:[#allocation8] sm:$0xff]
    %v422 = vld [vmem:[#allocation8 + $0x8] sm:$0xff]
    %v423 = vld [vmem:[#allocation8 + $0x10] sm:$0xff]
    %v424 = vld [vmem:[#allocation8 + $0x18] sm:$0xff]
    %v425 = vld [vmem:[#allocation8 + $0x20] sm:$0xff]
    %v426 = vld [vmem:[#allocation8 + $0x28] sm:$0xff]
    %v427 = vld [vmem:[#allocation8 + $0x30] sm:$0xff]
    %v428 = vld [vmem:[#allocation8 + $0x38] sm:$0xff]
    %v429 = vld [vmem:[#allocation8 + $0x40] sm:$0xff]
    %v430 = vld [vmem:[#allocation8 + $0x48] sm:$0xff]
    %v431 = vld [vmem:[#allocation8 + $0x50] sm:$0xff]
    %v432 = vld [vmem:[#allocation8 + $0x58] sm:$0xff]
    %v433 = vld [vmem:[#allocation8 + $0x60] sm:$0xff]
    %v434 = vld [vmem:[#allocation8 + $0x68] sm:$0xff]
    %v435 = vld [vmem:[#allocation8 + $0x70] sm:$0xff]
    %v436 = vld [vmem:[#allocation8 + $0x78] sm:$0xff]
    %v437 = vld [vmem:[%s4] sm:$0xf]
    %v438 = vld [vmem:[%s6] sm:$0x3]
    %v440 = vlaneseq
    %v441 = vshrl.u32 %v440, 7
    %v442 = vsub.s32 0, %v441
    %v443 = vrot.slane %v437, %v442
    %v444 = vlaneseq
    %v445 = vshrl.u32 %v444, 7
    %v446 = vsub.s32 1, %v445
    %v447 = vrot.slane %v437, %v446
    %v448 = vlaneseq
    %v449 = vshrl.u32 %v448, 7
    %v450 = vsub.s32 2, %v449
    %v451 = vrot.slane %v437, %v450
    %v452 = vlaneseq
    %v453 = vshrl.u32 %v452, 7
    %v454 = vsub.s32 3, %v453
    %v455 = vrot.slane %v437, %v454
    %v460 = vadd.f32 %v268, %v443
    %v461 = vadd.f32 %v270, %v447
    %v462 = vadd.f32 %v311, %v451
    %v463 = vadd.f32 %v313, %v455
    %v464 = vadd.f32 %v272, %v443
    %v465 = vadd.f32 %v274, %v447
    %v466 = vadd.f32 %v315, %v451
    %v467 = vadd.f32 %v317, %v455
    %v468 = vxor.u32 %v460, 2147483648
    %v469 = vxor.u32 %v461, 2147483648
    %v470 = vxor.u32 %v464, 2147483648
    %v471 = vxor.u32 %v465, 2147483648
    %v472 = vmul.f32 %v468, 1.442695
    %v473 = vpow.pop %v472
    %v474 = vmul.f32 %v469, 1.442695
    %v475 = vpow.pop %v474
    %v476 = vmul.f32 %v470, 1.442695
    %v477 = vpow.pop %v476
    %v478 = vmul.f32 %v471, 1.442695
    %v479 = vpow.pop %v478
    %v480 = vadd.f32 %v473, 1.0
    %v481 = vadd.f32 %v475, 1.0
    %v482 = vadd.f32 %v477, 1.0
    %v483 = vadd.f32 %v479, 1.0
    %v484 = vrcp.pop %v480
    %v485 = vmul.f32 1.0, %v484
    %v486 = vrcp.pop %v481
    %v487 = vmul.f32 1.0, %v486
    %v488 = vrcp.pop %v482
    %v489 = vmul.f32 1.0, %v488
    %v490 = vrcp.pop %v483
    %v491 = vmul.f32 1.0, %v490
    %v492 = vmul.f32 %v485, %v462
    %v493 = vmul.f32 %v487, %v463
    %v494 = vmul.f32 %v489, %v466
    %v495 = vmul.f32 %v491, %v467
    %v496 = vmax.f32 %v492, 0.0
    %v497 = vmax.f32 %v493, 0.0
    %v498 = vmax.f32 %v494, 0.0
    %v499 = vmax.f32 %v495, 0.0
    %500 = vmatprep.subr.mxu0 0.0
    %501 = vmatpush1.msra.mxu0 %v405
    %502 = vmatprep.subr.mxu0 0.0
    %503 = vmatpush1.msra.mxu0 %v406
    %504 = vmatprep.subr.mxu0 0.0
    %505 = vmatpush1.msra.mxu0 %v407
    %506 = vmatprep.subr.mxu0 0.0
    %507 = vmatpush1.msra.mxu0 %v408
    %508 = vmatprep.subr.mxu0 0.0
    %509 = vmatpush1.msra.mxu0 %v409
    %510 = vmatprep.subr.mxu0 0.0
    %511 = vmatpush1.msra.mxu0 %v410
    %512 = vmatprep.subr.mxu0 0.0
    %513 = vmatpush1.msra.mxu0 %v411
    %514 = vmatprep.subr.mxu0 0.0
    %515 = vmatpush1.msra.mxu0 %v412
    %516 = vmatprep.subr.mxu0 0.0
    %517 = vmatpush1.msra.mxu0 %v413
    %518 = vmatprep.subr.mxu0 0.0
    %519 = vmatpush1.msra.mxu0 %v414
    %520 = vmatprep.subr.mxu0 0.0
    %521 = vmatpush1.msra.mxu0 %v415
    %522 = vmatprep.subr.mxu0 0.0
    %523 = vmatpush1.msra.mxu0 %v416
    %524 = vmatprep.subr.mxu0 0.0
    %525 = vmatpush1.msra.mxu0 %v417
    %526 = vmatprep.subr.mxu0 0.0
    %527 = vmatpush1.msra.mxu0 %v418
    %528 = vmatprep.subr.mxu0 0.0
    %529 = vmatpush1.msra.mxu0 %v419
    %530 = vmatprep.subr.mxu0 0.0
    %531 = vmatpush1.msra.mxu0 %v420
    %532 = vmatprep.subr.mxu0 0.0
    %533 = vmatpush1.msra.mxu0 0.0
    %534 = vmatprep.subr.mxu0 0.0
    %535 = vmatpush1.msra.mxu0 0.0
    %536 = vmatprep.subr.mxu0 0.0
    %537 = vmatpush1.msra.mxu0 0.0
    %538 = vmatprep.subr.mxu0 0.0
    %539 = vmatpush1.msra.mxu0 0.0
    %540 = vmatprep.subr.mxu0 0.0
    %541 = vmatpush1.msra.mxu0 0.0
    %542 = vmatprep.subr.mxu0 0.0
    %543 = vmatpush1.msra.mxu0 0.0
    %544 = vmatprep.subr.mxu0 0.0
    %545 = vmatpush1.msra.mxu0 0.0
    %546 = vmatprep.subr.mxu0 0.0
    %547 = vmatpush1.msra.mxu0 0.0
    %548 = vmatprep.subr.mxu0 0.0
    %549 = vmatpush1.msra.mxu0 0.0
    %550 = vmatprep.subr.mxu0 0.0
    %551 = vmatpush1.msra.mxu0 0.0
    %552 = vmatprep.subr.mxu0 0.0
    %553 = vmatpush1.msra.mxu0 0.0
    %554 = vmatprep.subr.mxu0 0.0
    %555 = vmatpush1.msra.mxu0 0.0
    %556 = vmatprep.subr.mxu0 0.0
    %557 = vmatpush1.msra.mxu0 0.0
    %558 = vmatprep.subr.mxu0 0.0
    %559 = vmatpush1.msra.mxu0 0.0
    %560 = vmatprep.subr.mxu0 0.0
    %561 = vmatpush1.msra.mxu0 0.0
    %562 = vmatprep.subr.mxu0 0.0
    %563 = vmatpush1.msra.mxu0 0.0
    %564 = vmatprep.mubr.f32.mxu0 0.0
    %565 = vmatmul.mubr.f32.gmra.mrb[0].mxu0 %v496
    %v566 = vpop.f32.mrb[0].mxu0
    %v567 = vadd.f32 0.0, %v566
    %v568 = vpop.f32.mrb[0].mxu0
    %569 = vmatprep.mubr.f32.mxu0 0.0
    %570 = vmatmul.mubr.f32.gmra.mrb[0].mxu0 %v498
    %v571 = vpop.f32.mrb[0].mxu0
    %v572 = vadd.f32 0.0, %v571
    %v573 = vpop.f32.mrb[0].mxu0
    %574 = vdwg.mxu0
    %575 = vmatprep.subr.mxu0 0.0
    %576 = vmatpush1.msra.mxu0 %v421
    %577 = vmatprep.subr.mxu0 0.0
    %578 = vmatpush1.msra.mxu0 %v422
    %579 = vmatprep.subr.mxu0 0.0
    %580 = vmatpush1.msra.mxu0 %v423
    %581 = vmatprep.subr.mxu0 0.0
    %582 = vmatpush1.msra.mxu0 %v424
    %583 = vmatprep.subr.mxu0 0.0
    %584 = vmatpush1.msra.mxu0 %v425
    %585 = vmatprep.subr.mxu0 0.0
    %586 = vmatpush1.msra.mxu0 %v426
    %587 = vmatprep.subr.mxu0 0.0
    %588 = vmatpush1.msra.mxu0 %v427
    %589 = vmatprep.subr.mxu0 0.0
    %590 = vmatpush1.msra.mxu0 %v428
    %591 = vmatprep.subr.mxu0 0.0
    %592 = vmatpush1.msra.mxu0 %v429
    %593 = vmatprep.subr.mxu0 0.0
    %594 = vmatpush1.msra.mxu0 %v430
    %595 = vmatprep.subr.mxu0 0.0
    %596 = vmatpush1.msra.mxu0 %v431
    %597 = vmatprep.subr.mxu0 0.0
    %598 = vmatpush1.msra.mxu0 %v432
    %599 = vmatprep.subr.mxu0 0.0
    %600 = vmatpush1.msra.mxu0 %v433
    %601 = vmatprep.subr.mxu0 0.0
    %602 = vmatpush1.msra.mxu0 %v434
    %603 = vmatprep.subr.mxu0 0.0
    %604 = vmatpush1.msra.mxu0 %v435
    %605 = vmatprep.subr.mxu0 0.0
    %606 = vmatpush1.msra.mxu0 %v436
    %607 = vmatprep.subr.mxu0 0.0
    %608 = vmatpush1.msra.mxu0 0.0
    %609 = vmatprep.subr.mxu0 0.0
    %610 = vmatpush1.msra.mxu0 0.0
    %611 = vmatprep.subr.mxu0 0.0
    %612 = vmatpush1.msra.mxu0 0.0
    %613 = vmatprep.subr.mxu0 0.0
    %614 = vmatpush1.msra.mxu0 0.0
    %615 = vmatprep.subr.mxu0 0.0
    %616 = vmatpush1.msra.mxu0 0.0
    %617 = vmatprep.subr.mxu0 0.0
    %618 = vmatpush1.msra.mxu0 0.0
    %619 = vmatprep.subr.mxu0 0.0
    %620 = vmatpush1.msra.mxu0 0.0
    %621 = vmatprep.subr.mxu0 0.0
    %622 = vmatpush1.msra.mxu0 0.0
    %623 = vmatprep.subr.mxu0 0.0
    %624 = vmatpush1.msra.mxu0 0.0
    %625 = vmatprep.subr.mxu0 0.0
    %626 = vmatpush1.msra.mxu0 0.0
    %627 = vmatprep.subr.mxu0 0.0
    %628 = vmatpush1.msra.mxu0 0.0
    %629 = vmatprep.subr.mxu0 0.0
    %630 = vmatpush1.msra.mxu0 0.0
    %631 = vmatprep.subr.mxu0 0.0
    %632 = vmatpush1.msra.mxu0 0.0
    %633 = vmatprep.subr.mxu0 0.0
    %634 = vmatpush1.msra.mxu0 0.0
    %635 = vmatprep.subr.mxu0 0.0
    %636 = vmatpush1.msra.mxu0 0.0
    %637 = vmatprep.subr.mxu0 0.0
    %638 = vmatpush1.msra.mxu0 0.0
    %639 = vmatprep.mubr.f32.mxu0 0.0
    %640 = vmatmul.mubr.f32.gmra.mrb[0].mxu0 %v497
    %v641 = vpop.f32.mrb[0].mxu0
    %v642 = vadd.f32 0.0, %v641
    %v643 = vpop.f32.mrb[0].mxu0
    %644 = vmatprep.mubr.f32.mxu0 0.0
    %645 = vmatmul.mubr.f32.gmra.mrb[0].mxu0 %v499
    %v646 = vpop.f32.mrb[0].mxu0
    %v647 = vadd.f32 0.0, %v646
    %v648 = vpop.f32.mrb[0].mxu0
    %649 = vdwg.mxu0
    %v650 = vpack.c.bf16 %v572, %v567
    %v651 = vld [vmem:[#allocation10] sm:$0xff]
    %v652 = vld [vmem:[#allocation10 + $0x8] sm:$0xff]
    %v653 = vld [vmem:[#allocation10 + $0x10] sm:$0xff]
    %v654 = vld [vmem:[#allocation10 + $0x18] sm:$0xff]
    %v655 = vld [vmem:[#allocation10 + $0x20] sm:$0xff]
    %v656 = vld [vmem:[#allocation10 + $0x28] sm:$0xff]
    %v657 = vld [vmem:[#allocation10 + $0x30] sm:$0xff]
    %v658 = vld [vmem:[#allocation10 + $0x38] sm:$0xff]
    %v659 = vld [vmem:[#allocation10 + $0x40] sm:$0xff]
    %v660 = vld [vmem:[#allocation10 + $0x48] sm:$0xff]
    %v661 = vld [vmem:[#allocation10 + $0x50] sm:$0xff]
    %v662 = vld [vmem:[#allocation10 + $0x58] sm:$0xff]
    %v663 = vld [vmem:[#allocation10 + $0x60] sm:$0xff]
    %v664 = vld [vmem:[#allocation10 + $0x68] sm:$0xff]
    %v665 = vld [vmem:[#allocation10 + $0x70] sm:$0xff]
    %v666 = vld [vmem:[#allocation10 + $0x78] sm:$0xff]
    %v668 = vlaneseq
    %v669 = vshrl.u32 %v668, 7
    %v670 = vsub.s32 0, %v669
    %v671 = vrot.slane %v438, %v670
    %v672 = vlaneseq
    %v673 = vshrl.u32 %v672, 7
    %v674 = vsub.s32 1, %v673
    %v675 = vrot.slane %v438, %v674
    %v694 = vunpack.c.l.b16 %v651
    %v695 = vunpack.c.h.b16 %v651
    %v696 = vunpack.c.l.b16 %v652
    %v697 = vunpack.c.h.b16 %v652
    %v698 = vunpack.c.l.b16 %v653
    %v699 = vunpack.c.h.b16 %v653
    %v700 = vunpack.c.l.b16 %v654
    %v701 = vunpack.c.h.b16 %v654
    %v702 = vunpack.c.l.b16 %v655
    %v703 = vunpack.c.h.b16 %v655
    %v704 = vunpack.c.l.b16 %v656
    %v705 = vunpack.c.h.b16 %v656
    %v706 = vunpack.c.l.b16 %v657
    %v707 = vunpack.c.h.b16 %v657
    %v708 = vunpack.c.l.b16 %v658
    %v709 = vunpack.c.h.b16 %v658
    %v710 = vunpack.c.l.b16 %v659
    %v711 = vunpack.c.h.b16 %v659
    %v712 = vunpack.c.l.b16 %v660
    %v713 = vunpack.c.h.b16 %v660
    %v714 = vunpack.c.l.b16 %v661
    %v715 = vunpack.c.h.b16 %v661
    %v716 = vunpack.c.l.b16 %v662
    %v717 = vunpack.c.h.b16 %v662
    %v718 = vunpack.c.l.b16 %v663
    %v719 = vunpack.c.h.b16 %v663
    %v720 = vunpack.c.l.b16 %v664
    %v721 = vunpack.c.h.b16 %v664
    %v722 = vunpack.c.l.b16 %v665
    %v723 = vunpack.c.h.b16 %v665
    %v724 = vunpack.c.l.b16 %v666
    %v725 = vunpack.c.h.b16 %v666
    %v726 = vpack.c.b16 %v696, %v694
    %v727 = vpack.c.b16 %v697, %v695
    %v728 = vpack.c.b16 %v700, %v698
    %v729 = vpack.c.b16 %v701, %v699
    %v730 = vpack.c.b16 %v704, %v702
    %v731 = vpack.c.b16 %v705, %v703
    %v732 = vpack.c.b16 %v708, %v706
    %v733 = vpack.c.b16 %v709, %v707
    %v734 = vpack.c.b16 %v712, %v710
    %v735 = vpack.c.b16 %v713, %v711
    %v736 = vpack.c.b16 %v716, %v714
    %v737 = vpack.c.b16 %v717, %v715
    %v738 = vpack.c.b16 %v720, %v718
    %v739 = vpack.c.b16 %v721, %v719
    %v740 = vpack.c.b16 %v724, %v722
    %v741 = vpack.c.b16 %v725, %v723
    %758 = vmatprep.subr.bf16.mxu0 %v727
    %759 = vmatpush1.bf16.msra.mxu0 %v726
    %760 = vmatprep.subr.bf16.mxu0 %v729
    %761 = vmatpush1.bf16.msra.mxu0 %v728
    %762 = vmatprep.subr.bf16.mxu0 %v731
    %763 = vmatpush1.bf16.msra.mxu0 %v730
    %764 = vmatprep.subr.bf16.mxu0 %v733
    %765 = vmatpush1.bf16.msra.mxu0 %v732
    %766 = vmatprep.subr.bf16.mxu0 %v735
    %767 = vmatpush1.bf16.msra.mxu0 %v734
    %768 = vmatprep.subr.bf16.mxu0 %v737
    %769 = vmatpush1.bf16.msra.mxu0 %v736
    %770 = vmatprep.subr.bf16.mxu0 %v739
    %771 = vmatpush1.bf16.msra.mxu0 %v738
    %772 = vmatprep.subr.bf16.mxu0 %v741
    %773 = vmatpush1.bf16.msra.mxu0 %v740
    %774 = vmatprep.subr.bf16.mxu0 0
    %775 = vmatpush1.bf16.msra.mxu0 0
    %776 = vmatprep.subr.bf16.mxu0 0
    %777 = vmatpush1.bf16.msra.mxu0 0
    %778 = vmatprep.subr.bf16.mxu0 0
    %779 = vmatpush1.bf16.msra.mxu0 0
    %780 = vmatprep.subr.bf16.mxu0 0
    %781 = vmatpush1.bf16.msra.mxu0 0
    %782 = vmatprep.subr.bf16.mxu0 0
    %783 = vmatpush1.bf16.msra.mxu0 0
    %784 = vmatprep.subr.bf16.mxu0 0
    %785 = vmatpush1.bf16.msra.mxu0 0
    %786 = vmatprep.subr.bf16.mxu0 0
    %787 = vmatpush1.bf16.msra.mxu0 0
    %788 = vmatprep.subr.bf16.mxu0 0
    %789 = vmatpush1.bf16.msra.mxu0 0
    %790 = vmatprep.mubr.bf16.mxu0 0
    %791 = vmatmul.mubr.bf16.gmra.mrb[0].mxu0 %v650
    %v792 = vpop.f32.mrb[0].mxu0
    %v793 = vadd.f32 %v671, %v792
    %v794 = vpop.f32.mrb[0].mxu0
    %v795 = vadd.f32 %v675, %v794
    %v796 = vpop.f32.mrb[0].mxu0
    %v797 = vadd.f32 %v671, %v796
    %v798 = vpop.f32.mrb[0].mxu0
    %v799 = vadd.f32 %v675, %v798
    %800 = vdwg.mxu0
    %v801 = vxor.u32 %v793, 2147483648
    %v802 = vxor.u32 %v797, 2147483648
    %v803 = vmul.f32 %v801, 1.442695
    %v804 = vpow.pop %v803
    %v805 = vmul.f32 %v802, 1.442695
    %v806 = vpow.pop %v805
    %v807 = vadd.f32 %v804, 1.0
    %v808 = vadd.f32 %v806, 1.0
    %v809 = vrcp.pop %v807
    %v810 = vmul.f32 1.0, %v809
    %v811 = vrcp.pop %v808
    %v812 = vmul.f32 1.0, %v811
    %v813 = vmul.f32 %v810, %v795
    %v814 = vmul.f32 %v812, %v799
    %v815 = vmax.f32 %v813, 0.0
    %v816 = vmax.f32 %v814, 0.0
    %817 = vmatprep.subr.mxu0 0.0
    %818 = vmatpush1.msra.mxu0 %v421
    %819 = vmatprep.subr.mxu0 0.0
    %820 = vmatpush1.msra.mxu0 %v422
    %821 = vmatprep.subr.mxu0 0.0
    %822 = vmatpush1.msra.mxu0 %v423
    %823 = vmatprep.subr.mxu0 0.0
    %824 = vmatpush1.msra.mxu0 %v424
    %825 = vmatprep.subr.mxu0 0.0
    %826 = vmatpush1.msra.mxu0 %v425
    %827 = vmatprep.subr.mxu0 0.0
    %828 = vmatpush1.msra.mxu0 %v426
    %829 = vmatprep.subr.mxu0 0.0
    %830 = vmatpush1.msra.mxu0 %v427
    %831 = vmatprep.subr.mxu0 0.0
    %832 = vmatpush1.msra.mxu0 %v428
    %833 = vmatprep.subr.mxu0 0.0
    %834 = vmatpush1.msra.mxu0 %v429
    %835 = vmatprep.subr.mxu0 0.0
    %836 = vmatpush1.msra.mxu0 %v430
    %837 = vmatprep.subr.mxu0 0.0
    %838 = vmatpush1.msra.mxu0 %v431
    %839 = vmatprep.subr.mxu0 0.0
    %840 = vmatpush1.msra.mxu0 %v432
    %841 = vmatprep.subr.mxu0 0.0
    %842 = vmatpush1.msra.mxu0 %v433
    %843 = vmatprep.subr.mxu0 0.0
    %844 = vmatpush1.msra.mxu0 %v434
    %845 = vmatprep.subr.mxu0 0.0
    %846 = vmatpush1.msra.mxu0 %v435
    %847 = vmatprep.subr.mxu0 0.0
    %848 = vmatpush1.msra.mxu0 %v436
    %849 = vmatprep.subr.mxu0 0.0
    %850 = vmatpush1.msra.mxu0 0.0
    %851 = vmatprep.subr.mxu0 0.0
    %852 = vmatpush1.msra.mxu0 0.0
    %853 = vmatprep.subr.mxu0 0.0
    %854 = vmatpush1.msra.mxu0 0.0
    %855 = vmatprep.subr.mxu0 0.0
    %856 = vmatpush1.msra.mxu0 0.0
    %857 = vmatprep.subr.mxu0 0.0
    %858 = vmatpush1.msra.mxu0 0.0
    %859 = vmatprep.subr.mxu0 0.0
    %860 = vmatpush1.msra.mxu0 0.0
    %861 = vmatprep.subr.mxu0 0.0
    %862 = vmatpush1.msra.mxu0 0.0
    %863 = vmatprep.subr.mxu0 0.0
    %864 = vmatpush1.msra.mxu0 0.0
    %865 = vmatprep.subr.mxu0 0.0
    %866 = vmatpush1.msra.mxu0 0.0
    %867 = vmatprep.subr.mxu0 0.0
    %868 = vmatpush1.msra.mxu0 0.0
    %869 = vmatprep.subr.mxu0 0.0
    %870 = vmatpush1.msra.mxu0 0.0
    %871 = vmatprep.subr.mxu0 0.0
    %872 = vmatpush1.msra.mxu0 0.0
    %873 = vmatprep.subr.mxu0 0.0
    %874 = vmatpush1.msra.mxu0 0.0
    %875 = vmatprep.subr.mxu0 0.0
    %876 = vmatpush1.msra.mxu0 0.0
    %877 = vmatprep.subr.mxu0 0.0
    %878 = vmatpush1.msra.mxu0 0.0
    %879 = vmatprep.subr.mxu0 0.0
    %880 = vmatpush1.msra.mxu0 0.0
    %881 = vmatprep.mubr.f32.mxu0 0.0
    %882 = vmatmul.mubr.f32.gmra.mrb[0].mxu0 %v815
    %v883 = vpop.f32.mrb[0].mxu0
    %v884 = vadd.f32 %v642, %v883
    %v885 = vpop.f32.mrb[0].mxu0
    %886 = vmatprep.mubr.f32.mxu0 0.0
    %887 = vmatmul.mubr.f32.gmra.mrb[0].mxu0 %v816
    %v888 = vpop.f32.mrb[0].mxu0
    %v889 = vadd.f32 %v647, %v888
    %v890 = vpop.f32.mrb[0].mxu0
    %891 = vdwg.mxu0
    %vm892 = vcmp.ge.f32.partialorder %v884, 0.0
    %vm893 = vcmp.ge.f32.partialorder %v889, 0.0
    %v894 = vmul.f32 %v884, 0.01
    %v895 = vmul.f32 %v889, 0.01
    %v896 = vsel %vm892, %v884, %v894
    %v897 = vsel %vm893, %v889, %v895
    %v898 = vld [vmem:[%s8] sm:$0xf]
    %v899 = vld [vmem:[%s10] sm:$0x3]
    %v900 = vpack.c.bf16 %v897, %v896
    %v901 = vld [vmem:[#allocation11] sm:$0xff]
    %v902 = vld [vmem:[#allocation11 + $0x8] sm:$0xff]
    %v903 = vld [vmem:[#allocation11 + $0x10] sm:$0xff]
    %v904 = vld [vmem:[#allocation11 + $0x18] sm:$0xff]
    %v905 = vld [vmem:[#allocation11 + $0x20] sm:$0xff]
    %v906 = vld [vmem:[#allocation11 + $0x28] sm:$0xff]
    %v907 = vld [vmem:[#allocation11 + $0x30] sm:$0xff]
    %v908 = vld [vmem:[#allocation11 + $0x38] sm:$0xff]
    %v909 = vld [vmem:[#allocation11 + $0x40] sm:$0xff]
    %v910 = vld [vmem:[#allocation11 + $0x48] sm:$0xff]
    %v911 = vld [vmem:[#allocation11 + $0x50] sm:$0xff]
    %v912 = vld [vmem:[#allocation11 + $0x58] sm:$0xff]
    %v913 = vld [vmem:[#allocation11 + $0x60] sm:$0xff]
    %v914 = vld [vmem:[#allocation11 + $0x68] sm:$0xff]
    %v915 = vld [vmem:[#allocation11 + $0x70] sm:$0xff]
    %v916 = vld [vmem:[#allocation11 + $0x78] sm:$0xff]
    %v917 = vld [vmem:[#allocation11 + $0x80] sm:$0xff]
    %v918 = vld [vmem:[#allocation11 + $0x88] sm:$0xff]
    %v919 = vld [vmem:[#allocation11 + $0x90] sm:$0xff]
    %v920 = vld [vmem:[#allocation11 + $0x98] sm:$0xff]
    %v921 = vld [vmem:[#allocation11 + $0xa0] sm:$0xff]
    %v922 = vld [vmem:[#allocation11 + $0xa8] sm:$0xff]
    %v923 = vld [vmem:[#allocation11 + $0xb0] sm:$0xff]
    %v924 = vld [vmem:[#allocation11 + $0xb8] sm:$0xff]
    %v925 = vld [vmem:[#allocation11 + $0xc0] sm:$0xff]
    %v926 = vld [vmem:[#allocation11 + $0xc8] sm:$0xff]
    %v927 = vld [vmem:[#allocation11 + $0xd0] sm:$0xff]
    %v928 = vld [vmem:[#allocation11 + $0xd8] sm:$0xff]
    %v929 = vld [vmem:[#allocation11 + $0xe0] sm:$0xff]
    %v930 = vld [vmem:[#allocation11 + $0xe8] sm:$0xff]
    %v931 = vld [vmem:[#allocation11 + $0xf0] sm:$0xff]
    %v932 = vld [vmem:[#allocation11 + $0xf8] sm:$0xff]
    %v965 = vunpack.c.l.b16 %v901
    %v966 = vunpack.c.h.b16 %v901
    %v967 = vunpack.c.l.b16 %v902
    %v968 = vunpack.c.h.b16 %v902
    %v969 = vunpack.c.l.b16 %v903
    %v970 = vunpack.c.h.b16 %v903
    %v971 = vunpack.c.l.b16 %v904
    %v972 = vunpack.c.h.b16 %v904
    %v973 = vunpack.c.l.b16 %v905
    %v974 = vunpack.c.h.b16 %v905
    %v975 = vunpack.c.l.b16 %v906
    %v976 = vunpack.c.h.b16 %v906
    %v977 = vunpack.c.l.b16 %v907
    %v978 = vunpack.c.h.b16 %v907
    %v979 = vunpack.c.l.b16 %v908
    %v980 = vunpack.c.h.b16 %v908
    %v981 = vunpack.c.l.b16 %v909
    %v982 = vunpack.c.h.b16 %v909
    %v983 = vunpack.c.l.b16 %v910
    %v984 = vunpack.c.h.b16 %v910
    %v985 = vunpack.c.l.b16 %v911
    %v986 = vunpack.c.h.b16 %v911
    %v987 = vunpack.c.l.b16 %v912
    %v988 = vunpack.c.h.b16 %v912
    %v989 = vunpack.c.l.b16 %v913
    %v990 = vunpack.c.h.b16 %v913
    %v991 = vunpack.c.l.b16 %v914
    %v992 = vunpack.c.h.b16 %v914
    %v993 = vunpack.c.l.b16 %v915
    %v994 = vunpack.c.h.b16 %v915
    %v995 = vunpack.c.l.b16 %v916
    %v996 = vunpack.c.h.b16 %v916
    %v997 = vunpack.c.l.b16 %v917
    %v998 = vunpack.c.h.b16 %v917
    %v999 = vunpack.c.l.b16 %v918
    %v1000 = vunpack.c.h.b16 %v918
    %v1001 = vunpack.c.l.b16 %v919
    %v1002 = vunpack.c.h.b16 %v919
    %v1003 = vunpack.c.l.b16 %v920
    %v1004 = vunpack.c.h.b16 %v920
    %v1005 = vunpack.c.l.b16 %v921
    %v1006 = vunpack.c.h.b16 %v921
    %v1007 = vunpack.c.l.b16 %v922
    %v1008 = vunpack.c.h.b16 %v922
    %v1009 = vunpack.c.l.b16 %v923
    %v1010 = vunpack.c.h.b16 %v923
    %v1011 = vunpack.c.l.b16 %v924
    %v1012 = vunpack.c.h.b16 %v924
    %v1013 = vunpack.c.l.b16 %v925
    %v1014 = vunpack.c.h.b16 %v925
    %v1015 = vunpack.c.l.b16 %v926
    %v1016 = vunpack.c.h.b16 %v926
    %v1017 = vunpack.c.l.b16 %v927
    %v1018 = vunpack.c.h.b16 %v927
    %v1019 = vunpack.c.l.b16 %v928
    %v1020 = vunpack.c.h.b16 %v928
    %v1021 = vunpack.c.l.b16 %v929
    %v1022 = vunpack.c.h.b16 %v929
    %v1023 = vunpack.c.l.b16 %v930
    %v1024 = vunpack.c.h.b16 %v930
    %v1025 = vunpack.c.l.b16 %v931
    %v1026 = vunpack.c.h.b16 %v931
    %v1027 = vunpack.c.l.b16 %v932
    %v1028 = vunpack.c.h.b16 %v932
    %v1029 = vpack.c.b16 %v969, %v965
    %v1030 = vpack.c.b16 %v970, %v966
    %v1031 = vpack.c.b16 %v971, %v967
    %v1032 = vpack.c.b16 %v972, %v968
    %v1033 = vpack.c.b16 %v977, %v973
    %v1034 = vpack.c.b16 %v978, %v974
    %v1035 = vpack.c.b16 %v979, %v975
    %v1036 = vpack.c.b16 %v980, %v976
    %v1037 = vpack.c.b16 %v985, %v981
    %v1038 = vpack.c.b16 %v986, %v982
    %v1039 = vpack.c.b16 %v987, %v983
    %v1040 = vpack.c.b16 %v988, %v984
    %v1041 = vpack.c.b16 %v993, %v989
    %v1042 = vpack.c.b16 %v994, %v990
    %v1043 = vpack.c.b16 %v995, %v991
    %v1044 = vpack.c.b16 %v996, %v992
    %v1045 = vpack.c.b16 %v1001, %v997
    %v1046 = vpack.c.b16 %v1002, %v998
    %v1047 = vpack.c.b16 %v1003, %v999
    %v1048 = vpack.c.b16 %v1004, %v1000
    %v1049 = vpack.c.b16 %v1009, %v1005
    %v1050 = vpack.c.b16 %v1010, %v1006
    %v1051 = vpack.c.b16 %v1011, %v1007
    %v1052 = vpack.c.b16 %v1012, %v1008
    %v1053 = vpack.c.b16 %v1017, %v1013
    %v1054 = vpack.c.b16 %v1018, %v1014
    %v1055 = vpack.c.b16 %v1019, %v1015
    %v1056 = vpack.c.b16 %v1020, %v1016
    %v1057 = vpack.c.b16 %v1025, %v1021
    %v1058 = vpack.c.b16 %v1026, %v1022
    %v1059 = vpack.c.b16 %v1027, %v1023
    %v1060 = vpack.c.b16 %v1028, %v1024
    %1093 = vmatprep.subr.bf16.mxu0 %v1030
    %1094 = vmatpush1.bf16.msra.mxu0 %v1029
    %1095 = vmatprep.subr.bf16.mxu0 %v1034
    %1096 = vmatpush1.bf16.msra.mxu0 %v1033
    %1097 = vmatprep.subr.bf16.mxu0 %v1038
    %1098 = vmatpush1.bf16.msra.mxu0 %v1037
    %1099 = vmatprep.subr.bf16.mxu0 %v1042
    %1100 = vmatpush1.bf16.msra.mxu0 %v1041
    %1101 = vmatprep.subr.bf16.mxu0 %v1046
    %1102 = vmatpush1.bf16.msra.mxu0 %v1045
    %1103 = vmatprep.subr.bf16.mxu0 %v1050
    %1104 = vmatpush1.bf16.msra.mxu0 %v1049
    %1105 = vmatprep.subr.bf16.mxu0 %v1054
    %1106 = vmatpush1.bf16.msra.mxu0 %v1053
    %1107 = vmatprep.subr.bf16.mxu0 %v1058
    %1108 = vmatpush1.bf16.msra.mxu0 %v1057
    %1109 = vmatprep.subr.bf16.mxu0 0
    %1110 = vmatpush1.bf16.msra.mxu0 0
    %1111 = vmatprep.subr.bf16.mxu0 0
    %1112 = vmatpush1.bf16.msra.mxu0 0
    %1113 = vmatprep.subr.bf16.mxu0 0
    %1114 = vmatpush1.bf16.msra.mxu0 0
    %1115 = vmatprep.subr.bf16.mxu0 0
    %1116 = vmatpush1.bf16.msra.mxu0 0
    %1117 = vmatprep.subr.bf16.mxu0 0
    %1118 = vmatpush1.bf16.msra.mxu0 0
    %1119 = vmatprep.subr.bf16.mxu0 0
    %1120 = vmatpush1.bf16.msra.mxu0 0
    %1121 = vmatprep.subr.bf16.mxu0 0
    %1122 = vmatpush1.bf16.msra.mxu0 0
    %1123 = vmatprep.subr.bf16.mxu0 0
    %1124 = vmatpush1.bf16.msra.mxu0 0
    %1125 = vmatprep.mubr.bf16.mxu0 0
    %1126 = vmatmul.mubr.bf16.gmra.mrb[0].mxu0 %v900
    %v1127 = vpop.f32.mrb[0].mxu0
    %v1128 = vadd.f32 %v354, %v1127
    %v1129 = vpop.f32.mrb[0].mxu0
    %v1130 = vadd.f32 %v356, %v1129
    %v1131 = vpop.f32.mrb[0].mxu0
    %v1132 = vadd.f32 %v358, %v1131
    %v1133 = vpop.f32.mrb[0].mxu0
    %v1134 = vadd.f32 %v360, %v1133
    %1135 = vdwg.mxu0
    %1136 = vmatprep.subr.bf16.mxu0 %v1032
    %1137 = vmatpush1.bf16.msra.mxu0 %v1031
    %1138 = vmatprep.subr.bf16.mxu0 %v1036
    %1139 = vmatpush1.bf16.msra.mxu0 %v1035
    %1140 = vmatprep.subr.bf16.mxu0 %v1040
    %1141 = vmatpush1.bf16.msra.mxu0 %v1039
    %1142 = vmatprep.subr.bf16.mxu0 %v1044
    %1143 = vmatpush1.bf16.msra.mxu0 %v1043
    %1144 = vmatprep.subr.bf16.mxu0 %v1048
    %1145 = vmatpush1.bf16.msra.mxu0 %v1047
    %1146 = vmatprep.subr.bf16.mxu0 %v1052
    %1147 = vmatpush1.bf16.msra.mxu0 %v1051
    %1148 = vmatprep.subr.bf16.mxu0 %v1056
    %1149 = vmatpush1.bf16.msra.mxu0 %v1055
    %1150 = vmatprep.subr.bf16.mxu0 %v1060
    %1151 = vmatpush1.bf16.msra.mxu0 %v1059
    %1152 = vmatprep.subr.bf16.mxu0 0
    %1153 = vmatpush1.bf16.msra.mxu0 0
    %1154 = vmatprep.subr.bf16.mxu0 0
    %1155 = vmatpush1.bf16.msra.mxu0 0
    %1156 = vmatprep.subr.bf16.mxu0 0
    %1157 = vmatpush1.bf16.msra.mxu0 0
    %1158 = vmatprep.subr.bf16.mxu0 0
    %1159 = vmatpush1.bf16.msra.mxu0 0
    %1160 = vmatprep.subr.bf16.mxu0 0
    %1161 = vmatpush1.bf16.msra.mxu0 0
    %1162 = vmatprep.subr.bf16.mxu0 0
    %1163 = vmatpush1.bf16.msra.mxu0 0
    %1164 = vmatprep.subr.bf16.mxu0 0
    %1165 = vmatpush1.bf16.msra.mxu0 0
    %1166 = vmatprep.subr.bf16.mxu0 0
    %1167 = vmatpush1.bf16.msra.mxu0 0
    %1168 = vmatprep.mubr.bf16.mxu0 0
    %1169 = vmatmul.mubr.bf16.gmra.mrb[0].mxu0 %v900
    %v1170 = vpop.f32.mrb[0].mxu0
    %v1171 = vadd.f32 %v397, %v1170
    %v1172 = vpop.f32.mrb[0].mxu0
    %v1173 = vadd.f32 %v399, %v1172
    %v1174 = vpop.f32.mrb[0].mxu0
    %v1175 = vadd.f32 %v401, %v1174
    %v1176 = vpop.f32.mrb[0].mxu0
    %v1177 = vadd.f32 %v403, %v1176
    %1178 = vdwg.mxu0
    %v1180 = vlaneseq
    %v1181 = vshrl.u32 %v1180, 7
    %v1182 = vsub.s32 0, %v1181
    %v1183 = vrot.slane %v898, %v1182
    %v1184 = vlaneseq
    %v1185 = vshrl.u32 %v1184, 7
    %v1186 = vsub.s32 1, %v1185
    %v1187 = vrot.slane %v898, %v1186
    %v1188 = vlaneseq
    %v1189 = vshrl.u32 %v1188, 7
    %v1190 = vsub.s32 2, %v1189
    %v1191 = vrot.slane %v898, %v1190
    %v1192 = vlaneseq
    %v1193 = vshrl.u32 %v1192, 7
    %v1194 = vsub.s32 3, %v1193
    %v1195 = vrot.slane %v898, %v1194
    %v1200 = vadd.f32 %v1128, %v1183
    %v1201 = vadd.f32 %v1130, %v1187
    %v1202 = vadd.f32 %v1171, %v1191
    %v1203 = vadd.f32 %v1173, %v1195
    %v1204 = vadd.f32 %v1132, %v1183
    %v1205 = vadd.f32 %v1134, %v1187
    %v1206 = vadd.f32 %v1175, %v1191
    %v1207 = vadd.f32 %v1177, %v1195
    %v1208 = vxor.u32 %v1200, 2147483648
    %v1209 = vxor.u32 %v1201, 2147483648
    %v1210 = vxor.u32 %v1204, 2147483648
    %v1211 = vxor.u32 %v1205, 2147483648
    %v1212 = vmul.f32 %v1208, 1.442695
    %v1213 = vpow.pop %v1212
    %v1214 = vmul.f32 %v1209, 1.442695
    %v1215 = vpow.pop %v1214
    %v1216 = vmul.f32 %v1210, 1.442695
    %v1217 = vpow.pop %v1216
    %v1218 = vmul.f32 %v1211, 1.442695
    %v1219 = vpow.pop %v1218
    %v1220 = vadd.f32 %v1213, 1.0
    %v1221 = vadd.f32 %v1215, 1.0
    %v1222 = vadd.f32 %v1217, 1.0
    %v1223 = vadd.f32 %v1219, 1.0
    %v1224 = vrcp.pop %v1220
    %v1225 = vmul.f32 1.0, %v1224
    %v1226 = vrcp.pop %v1221
    %v1227 = vmul.f32 1.0, %v1226
    %v1228 = vrcp.pop %v1222
    %v1229 = vmul.f32 1.0, %v1228
    %v1230 = vrcp.pop %v1223
    %v1231 = vmul.f32 1.0, %v1230
    %v1232 = vmul.f32 %v1225, %v1202
    %v1233 = vmul.f32 %v1227, %v1203
    %v1234 = vmul.f32 %v1229, %v1206
    %v1235 = vmul.f32 %v1231, %v1207
    %v1236 = vmax.f32 %v1232, 0.0
    %v1237 = vmax.f32 %v1233, 0.0
    %v1238 = vmax.f32 %v1234, 0.0
    %v1239 = vmax.f32 %v1235, 0.0
    %1240 = vmatprep.subr.mxu0 0.0
    %1241 = vmatpush1.msra.mxu0 %v405
    %1242 = vmatprep.subr.mxu0 0.0
    %1243 = vmatpush1.msra.mxu0 %v406
    %1244 = vmatprep.subr.mxu0 0.0
    %1245 = vmatpush1.msra.mxu0 %v407
    %1246 = vmatprep.subr.mxu0 0.0
    %1247 = vmatpush1.msra.mxu0 %v408
    %1248 = vmatprep.subr.mxu0 0.0
    %1249 = vmatpush1.msra.mxu0 %v409
    %1250 = vmatprep.subr.mxu0 0.0
    %1251 = vmatpush1.msra.mxu0 %v410
    %1252 = vmatprep.subr.mxu0 0.0
    %1253 = vmatpush1.msra.mxu0 %v411
    %1254 = vmatprep.subr.mxu0 0.0
    %1255 = vmatpush1.msra.mxu0 %v412
    %1256 = vmatprep.subr.mxu0 0.0
    %1257 = vmatpush1.msra.mxu0 %v413
    %1258 = vmatprep.subr.mxu0 0.0
    %1259 = vmatpush1.msra.mxu0 %v414
    %1260 = vmatprep.subr.mxu0 0.0
    %1261 = vmatpush1.msra.mxu0 %v415
    %1262 = vmatprep.subr.mxu0 0.0
    %1263 = vmatpush1.msra.mxu0 %v416
    %1264 = vmatprep.subr.mxu0 0.0
    %1265 = vmatpush1.msra.mxu0 %v417
    %1266 = vmatprep.subr.mxu0 0.0
    %1267 = vmatpush1.msra.mxu0 %v418
    %1268 = vmatprep.subr.mxu0 0.0
    %1269 = vmatpush1.msra.mxu0 %v419
    %1270 = vmatprep.subr.mxu0 0.0
    %1271 = vmatpush1.msra.mxu0 %v420
    %1272 = vmatprep.subr.mxu0 0.0
    %1273 = vmatpush1.msra.mxu0 0.0
    %1274 = vmatprep.subr.mxu0 0.0
    %1275 = vmatpush1.msra.mxu0 0.0
    %1276 = vmatprep.subr.mxu0 0.0
    %1277 = vmatpush1.msra.mxu0 0.0
    %1278 = vmatprep.subr.mxu0 0.0
    %1279 = vmatpush1.msra.mxu0 0.0
    %1280 = vmatprep.subr.mxu0 0.0
    %1281 = vmatpush1.msra.mxu0 0.0
    %1282 = vmatprep.subr.mxu0 0.0
    %1283 = vmatpush1.msra.mxu0 0.0
    %1284 = vmatprep.subr.mxu0 0.0
    %1285 = vmatpush1.msra.mxu0 0.0
    %1286 = vmatprep.subr.mxu0 0.0
    %1287 = vmatpush1.msra.mxu0 0.0
    %1288 = vmatprep.subr.mxu0 0.0
    %1289 = vmatpush1.msra.mxu0 0.0
    %1290 = vmatprep.subr.mxu0 0.0
    %1291 = vmatpush1.msra.mxu0 0.0
    %1292 = vmatprep.subr.mxu0 0.0
    %1293 = vmatpush1.msra.mxu0 0.0
    %1294 = vmatprep.subr.mxu0 0.0
    %1295 = vmatpush1.msra.mxu0 0.0
    %1296 = vmatprep.subr.mxu0 0.0
    %1297 = vmatpush1.msra.mxu0 0.0
    %1298 = vmatprep.subr.mxu0 0.0
    %1299 = vmatpush1.msra.mxu0 0.0
    %1300 = vmatprep.subr.mxu0 0.0
    %1301 = vmatpush1.msra.mxu0 0.0
    %1302 = vmatprep.subr.mxu0 0.0
    %1303 = vmatpush1.msra.mxu0 0.0
    %1304 = vmatprep.mubr.f32.mxu0 0.0
    %1305 = vmatmul.mubr.f32.gmra.mrb[0].mxu0 %v1236
    %v1306 = vpop.f32.mrb[0].mxu0
    %v1307 = vadd.f32 0.0, %v1306
    %v1308 = vpop.f32.mrb[0].mxu0
    %1309 = vmatprep.mubr.f32.mxu0 0.0
    %1310 = vmatmul.mubr.f32.gmra.mrb[0].mxu0 %v1238
    %v1311 = vpop.f32.mrb[0].mxu0
    %v1312 = vadd.f32 0.0, %v1311
    %v1313 = vpop.f32.mrb[0].mxu0
    %1314 = vdwg.mxu0
    %1315 = vmatprep.subr.mxu0 0.0
    %1316 = vmatpush1.msra.mxu0 %v421
    %1317 = vmatprep.subr.mxu0 0.0
    %1318 = vmatpush1.msra.mxu0 %v422
    %1319 = vmatprep.subr.mxu0 0.0
    %1320 = vmatpush1.msra.mxu0 %v423
    %1321 = vmatprep.subr.mxu0 0.0
    %1322 = vmatpush1.msra.mxu0 %v424
    %1323 = vmatprep.subr.mxu0 0.0
    %1324 = vmatpush1.msra.mxu0 %v425
    %1325 = vmatprep.subr.mxu0 0.0
    %1326 = vmatpush1.msra.mxu0 %v426
    %1327 = vmatprep.subr.mxu0 0.0
    %1328 = vmatpush1.msra.mxu0 %v427
    %1329 = vmatprep.subr.mxu0 0.0
    %1330 = vmatpush1.msra.mxu0 %v428
    %1331 = vmatprep.subr.mxu0 0.0
    %1332 = vmatpush1.msra.mxu0 %v429
    %1333 = vmatprep.subr.mxu0 0.0
    %1334 = vmatpush1.msra.mxu0 %v430
    %1335 = vmatprep.subr.mxu0 0.0
    %1336 = vmatpush1.msra.mxu0 %v431
    %1337 = vmatprep.subr.mxu0 0.0
    %1338 = vmatpush1.msra.mxu0 %v432
    %1339 = vmatprep.subr.mxu0 0.0
    %1340 = vmatpush1.msra.mxu0 %v433
    %1341 = vmatprep.subr.mxu0 0.0
    %1342 = vmatpush1.msra.mxu0 %v434
    %1343 = vmatprep.subr.mxu0 0.0
    %1344 = vmatpush1.msra.mxu0 %v435
    %1345 = vmatprep.subr.mxu0 0.0
    %1346 = vmatpush1.msra.mxu0 %v436
    %1347 = vmatprep.subr.mxu0 0.0
    %1348 = vmatpush1.msra.mxu0 0.0
    %1349 = vmatprep.subr.mxu0 0.0
    %1350 = vmatpush1.msra.mxu0 0.0
    %1351 = vmatprep.subr.mxu0 0.0
    %1352 = vmatpush1.msra.mxu0 0.0
    %1353 = vmatprep.subr.mxu0 0.0
    %1354 = vmatpush1.msra.mxu0 0.0
    %1355 = vmatprep.subr.mxu0 0.0
    %1356 = vmatpush1.msra.mxu0 0.0
    %1357 = vmatprep.subr.mxu0 0.0
    %1358 = vmatpush1.msra.mxu0 0.0
    %1359 = vmatprep.subr.mxu0 0.0
    %1360 = vmatpush1.msra.mxu0 0.0
    %1361 = vmatprep.subr.mxu0 0.0
    %1362 = vmatpush1.msra.mxu0 0.0
    %1363 = vmatprep.subr.mxu0 0.0
    %1364 = vmatpush1.msra.mxu0 0.0
    %1365 = vmatprep.subr.mxu0 0.0
    %1366 = vmatpush1.msra.mxu0 0.0
    %1367 = vmatprep.subr.mxu0 0.0
    %1368 = vmatpush1.msra.mxu0 0.0
    %1369 = vmatprep.subr.mxu0 0.0
    %1370 = vmatpush1.msra.mxu0 0.0
    %1371 = vmatprep.subr.mxu0 0.0
    %1372 = vmatpush1.msra.mxu0 0.0
    %1373 = vmatprep.subr.mxu0 0.0
    %1374 = vmatpush1.msra.mxu0 0.0
    %1375 = vmatprep.subr.mxu0 0.0
    %1376 = vmatpush1.msra.mxu0 0.0
    %1377 = vmatprep.subr.mxu0 0.0
    %1378 = vmatpush1.msra.mxu0 0.0
    %1379 = vmatprep.mubr.f32.mxu0 0.0
    %1380 = vmatmul.mubr.f32.gmra.mrb[0].mxu0 %v1237
    %v1381 = vpop.f32.mrb[0].mxu0
    %v1382 = vadd.f32 0.0, %v1381
    %v1383 = vpop.f32.mrb[0].mxu0
    %1384 = vmatprep.mubr.f32.mxu0 0.0
    %1385 = vmatmul.mubr.f32.gmra.mrb[0].mxu0 %v1239
    %v1386 = vpop.f32.mrb[0].mxu0
    %v1387 = vadd.f32 0.0, %v1386
    %v1388 = vpop.f32.mrb[0].mxu0
    %1389 = vdwg.mxu0
    %v1390 = vpack.c.bf16 %v1312, %v1307
    %v1391 = vld [vmem:[#allocation13] sm:$0xff]
    %v1392 = vld [vmem:[#allocation13 + $0x8] sm:$0xff]
    %v1393 = vld [vmem:[#allocation13 + $0x10] sm:$0xff]
    %v1394 = vld [vmem:[#allocation13 + $0x18] sm:$0xff]
    %v1395 = vld [vmem:[#allocation13 + $0x20] sm:$0xff]
    %v1396 = vld [vmem:[#allocation13 + $0x28] sm:$0xff]
    %v1397 = vld [vmem:[#allocation13 + $0x30] sm:$0xff]
    %v1398 = vld [vmem:[#allocation13 + $0x38] sm:$0xff]
    %v1399 = vld [vmem:[#allocation13 + $0x40] sm:$0xff]
    %v1400 = vld [vmem:[#allocation13 + $0x48] sm:$0xff]
    %v1401 = vld [vmem:[#allocation13 + $0x50] sm:$0xff]
    %v1402 = vld [vmem:[#allocation13 + $0x58] sm:$0xff]
    %v1403 = vld [vmem:[#allocation13 + $0x60] sm:$0xff]
    %v1404 = vld [vmem:[#allocation13 + $0x68] sm:$0xff]
    %v1405 = vld [vmem:[#allocation13 + $0x70] sm:$0xff]
    %v1406 = vld [vmem:[#allocation13 + $0x78] sm:$0xff]
    %v1408 = vlaneseq
    %v1409 = vshrl.u32 %v1408, 7
    %v1410 = vsub.s32 0, %v1409
    %v1411 = vrot.slane %v899, %v1410
    %v1412 = vlaneseq
    %v1413 = vshrl.u32 %v1412, 7
    %v1414 = vsub.s32 1, %v1413
    %v1415 = vrot.slane %v899, %v1414
    %v1434 = vunpack.c.l.b16 %v1391
    %v1435 = vunpack.c.h.b16 %v1391
    %v1436 = vunpack.c.l.b16 %v1392
    %v1437 = vunpack.c.h.b16 %v1392
    %v1438 = vunpack.c.l.b16 %v1393
    %v1439 = vunpack.c.h.b16 %v1393
    %v1440 = vunpack.c.l.b16 %v1394
    %v1441 = vunpack.c.h.b16 %v1394
    %v1442 = vunpack.c.l.b16 %v1395
    %v1443 = vunpack.c.h.b16 %v1395
    %v1444 = vunpack.c.l.b16 %v1396
    %v1445 = vunpack.c.h.b16 %v1396
    %v1446 = vunpack.c.l.b16 %v1397
    %v1447 = vunpack.c.h.b16 %v1397
    %v1448 = vunpack.c.l.b16 %v1398
    %v1449 = vunpack.c.h.b16 %v1398
    %v1450 = vunpack.c.l.b16 %v1399
    %v1451 = vunpack.c.h.b16 %v1399
    %v1452 = vunpack.c.l.b16 %v1400
    %v1453 = vunpack.c.h.b16 %v1400
    %v1454 = vunpack.c.l.b16 %v1401
    %v1455 = vunpack.c.h.b16 %v1401
    %v1456 = vunpack.c.l.b16 %v1402
    %v1457 = vunpack.c.h.b16 %v1402
    %v1458 = vunpack.c.l.b16 %v1403
    %v1459 = vunpack.c.h.b16 %v1403
    %v1460 = vunpack.c.l.b16 %v1404
    %v1461 = vunpack.c.h.b16 %v1404
    %v1462 = vunpack.c.l.b16 %v1405
    %v1463 = vunpack.c.h.b16 %v1405
    %v1464 = vunpack.c.l.b16 %v1406
    %v1465 = vunpack.c.h.b16 %v1406
    %v1466 = vpack.c.b16 %v1436, %v1434
    %v1467 = vpack.c.b16 %v1437, %v1435
    %v1468 = vpack.c.b16 %v1440, %v1438
    %v1469 = vpack.c.b16 %v1441, %v1439
    %v1470 = vpack.c.b16 %v1444, %v1442
    %v1471 = vpack.c.b16 %v1445, %v1443
    %v1472 = vpack.c.b16 %v1448, %v1446
    %v1473 = vpack.c.b16 %v1449, %v1447
    %v1474 = vpack.c.b16 %v1452, %v1450
    %v1475 = vpack.c.b16 %v1453, %v1451
    %v1476 = vpack.c.b16 %v1456, %v1454
    %v1477 = vpack.c.b16 %v1457, %v1455
    %v1478 = vpack.c.b16 %v1460, %v1458
    %v1479 = vpack.c.b16 %v1461, %v1459
    %v1480 = vpack.c.b16 %v1464, %v1462
    %v1481 = vpack.c.b16 %v1465, %v1463
    %1498 = vmatprep.subr.bf16.mxu0 %v1467
    %1499 = vmatpush1.bf16.msra.mxu0 %v1466
    %1500 = vmatprep.subr.bf16.mxu0 %v1469
    %1501 = vmatpush1.bf16.msra.mxu0 %v1468
    %1502 = vmatprep.subr.bf16.mxu0 %v1471
    %1503 = vmatpush1.bf16.msra.mxu0 %v1470
    %1504 = vmatprep.subr.bf16.mxu0 %v1473
    %1505 = vmatpush1.bf16.msra.mxu0 %v1472
    %1506 = vmatprep.subr.bf16.mxu0 %v1475
    %1507 = vmatpush1.bf16.msra.mxu0 %v1474
    %1508 = vmatprep.subr.bf16.mxu0 %v1477
    %1509 = vmatpush1.bf16.msra.mxu0 %v1476
    %1510 = vmatprep.subr.bf16.mxu0 %v1479
    %1511 = vmatpush1.bf16.msra.mxu0 %v1478
    %1512 = vmatprep.subr.bf16.mxu0 %v1481
    %1513 = vmatpush1.bf16.msra.mxu0 %v1480
    %1514 = vmatprep.subr.bf16.mxu0 0
    %1515 = vmatpush1.bf16.msra.mxu0 0
    %1516 = vmatprep.subr.bf16.mxu0 0
    %1517 = vmatpush1.bf16.msra.mxu0 0
    %1518 = vmatprep.subr.bf16.mxu0 0
    %1519 = vmatpush1.bf16.msra.mxu0 0
    %1520 = vmatprep.subr.bf16.mxu0 0
    %1521 = vmatpush1.bf16.msra.mxu0 0
    %1522 = vmatprep.subr.bf16.mxu0 0
    %1523 = vmatpush1.bf16.msra.mxu0 0
    %1524 = vmatprep.subr.bf16.mxu0 0
    %1525 = vmatpush1.bf16.msra.mxu0 0
    %1526 = vmatprep.subr.bf16.mxu0 0
    %1527 = vmatpush1.bf16.msra.mxu0 0
    %1528 = vmatprep.subr.bf16.mxu0 0
    %1529 = vmatpush1.bf16.msra.mxu0 0
    %1530 = vmatprep.mubr.bf16.mxu0 0
    %1531 = vmatmul.mubr.bf16.gmra.mrb[0].mxu0 %v1390
    %v1532 = vpop.f32.mrb[0].mxu0
    %v1533 = vadd.f32 %v1411, %v1532
    %v1534 = vpop.f32.mrb[0].mxu0
    %v1535 = vadd.f32 %v1415, %v1534
    %v1536 = vpop.f32.mrb[0].mxu0
    %v1537 = vadd.f32 %v1411, %v1536
    %v1538 = vpop.f32.mrb[0].mxu0
    %v1539 = vadd.f32 %v1415, %v1538
    %1540 = vdwg.mxu0
    %v1541 = vxor.u32 %v1533, 2147483648
    %v1542 = vxor.u32 %v1537, 2147483648
    %v1543 = vmul.f32 %v1541, 1.442695
    %v1544 = vpow.pop %v1543
    %v1545 = vmul.f32 %v1542, 1.442695
    %v1546 = vpow.pop %v1545
    %v1547 = vadd.f32 %v1544, 1.0
    %v1548 = vadd.f32 %v1546, 1.0
    %v1549 = vrcp.pop %v1547
    %v1550 = vmul.f32 1.0, %v1549
    %v1551 = vrcp.pop %v1548
    %v1552 = vmul.f32 1.0, %v1551
    %v1553 = vmul.f32 %v1550, %v1535
    %v1554 = vmul.f32 %v1552, %v1539
    %v1555 = vmax.f32 %v1553, 0.0
    %v1556 = vmax.f32 %v1554, 0.0
    %1557 = vmatprep.subr.mxu0 0.0
    %1558 = vmatpush1.msra.mxu0 %v421
    %1559 = vmatprep.subr.mxu0 0.0
    %1560 = vmatpush1.msra.mxu0 %v422
    %1561 = vmatprep.subr.mxu0 0.0
    %1562 = vmatpush1.msra.mxu0 %v423
    %1563 = vmatprep.subr.mxu0 0.0
    %1564 = vmatpush1.msra.mxu0 %v424
    %1565 = vmatprep.subr.mxu0 0.0
    %1566 = vmatpush1.msra.mxu0 %v425
    %1567 = vmatprep.subr.mxu0 0.0
    %1568 = vmatpush1.msra.mxu0 %v426
    %1569 = vmatprep.subr.mxu0 0.0
    %1570 = vmatpush1.msra.mxu0 %v427
    %1571 = vmatprep.subr.mxu0 0.0
    %1572 = vmatpush1.msra.mxu0 %v428
    %1573 = vmatprep.subr.mxu0 0.0
    %1574 = vmatpush1.msra.mxu0 %v429
    %1575 = vmatprep.subr.mxu0 0.0
    %1576 = vmatpush1.msra.mxu0 %v430
    %1577 = vmatprep.subr.mxu0 0.0
    %1578 = vmatpush1.msra.mxu0 %v431
    %1579 = vmatprep.subr.mxu0 0.0
    %1580 = vmatpush1.msra.mxu0 %v432
    %1581 = vmatprep.subr.mxu0 0.0
    %1582 = vmatpush1.msra.mxu0 %v433
    %1583 = vmatprep.subr.mxu0 0.0
    %1584 = vmatpush1.msra.mxu0 %v434
    %1585 = vmatprep.subr.mxu0 0.0
    %1586 = vmatpush1.msra.mxu0 %v435
    %1587 = vmatprep.subr.mxu0 0.0
    %1588 = vmatpush1.msra.mxu0 %v436
    %1589 = vmatprep.subr.mxu0 0.0
    %1590 = vmatpush1.msra.mxu0 0.0
    %1591 = vmatprep.subr.mxu0 0.0
    %1592 = vmatpush1.msra.mxu0 0.0
    %1593 = vmatprep.subr.mxu0 0.0
    %1594 = vmatpush1.msra.mxu0 0.0
    %1595 = vmatprep.subr.mxu0 0.0
    %1596 = vmatpush1.msra.mxu0 0.0
    %1597 = vmatprep.subr.mxu0 0.0
    %1598 = vmatpush1.msra.mxu0 0.0
    %1599 = vmatprep.subr.mxu0 0.0
    %1600 = vmatpush1.msra.mxu0 0.0
    %1601 = vmatprep.subr.mxu0 0.0
    %1602 = vmatpush1.msra.mxu0 0.0
    %1603 = vmatprep.subr.mxu0 0.0
    %1604 = vmatpush1.msra.mxu0 0.0
    %1605 = vmatprep.subr.mxu0 0.0
    %1606 = vmatpush1.msra.mxu0 0.0
    %1607 = vmatprep.subr.mxu0 0.0
    %1608 = vmatpush1.msra.mxu0 0.0
    %1609 = vmatprep.subr.mxu0 0.0
    %1610 = vmatpush1.msra.mxu0 0.0
    %1611 = vmatprep.subr.mxu0 0.0
    %1612 = vmatpush1.msra.mxu0 0.0
    %1613 = vmatprep.subr.mxu0 0.0
    %1614 = vmatpush1.msra.mxu0 0.0
    %1615 = vmatprep.subr.mxu0 0.0
    %1616 = vmatpush1.msra.mxu0 0.0
    %1617 = vmatprep.subr.mxu0 0.0
    %1618 = vmatpush1.msra.mxu0 0.0
    %1619 = vmatprep.subr.mxu0 0.0
    %1620 = vmatpush1.msra.mxu0 0.0
    %1621 = vmatprep.mubr.f32.mxu0 0.0
    %1622 = vmatmul.mubr.f32.gmra.mrb[0].mxu0 %v1555
    %v1623 = vpop.f32.mrb[0].mxu0
    %v1624 = vadd.f32 %v1382, %v1623
    %v1625 = vpop.f32.mrb[0].mxu0
    %1626 = vmatprep.mubr.f32.mxu0 0.0
    %1627 = vmatmul.mubr.f32.gmra.mrb[0].mxu0 %v1556
    %v1628 = vpop.f32.mrb[0].mxu0
    %v1629 = vadd.f32 %v1387, %v1628
    %v1630 = vpop.f32.mrb[0].mxu0
    %1631 = vdwg.mxu0
    %vm1632 = vcmp.ge.f32.partialorder %v1624, 0.0
    %vm1633 = vcmp.ge.f32.partialorder %v1629, 0.0
    %v1634 = vmul.f32 %v1624, 0.01
    %v1635 = vmul.f32 %v1629, 0.01
    %v1636 = vsel %vm1632, %v1624, %v1634
    %v1637 = vsel %vm1633, %v1629, %v1635
    %v1638 = vpack.c.bf16 %v1637, %v1636
    %v1639 = vld [vmem:[#allocation14] sm:$0xf]
    %v1640 = vld [vmem:[#allocation14 + $0x4] sm:$0xf]
    %v1641 = vld [vmem:[#allocation14 + $0x8] sm:$0xf]
    %v1642 = vld [vmem:[#allocation14 + $0xc] sm:$0xf]
    %v1643 = vld [vmem:[#allocation14 + $0x10] sm:$0xf]
    %v1644 = vld [vmem:[#allocation14 + $0x14] sm:$0xf]
    %v1645 = vld [vmem:[#allocation14 + $0x18] sm:$0xf]
    %v1646 = vld [vmem:[#allocation14 + $0x1c] sm:$0xf]
    %v1647 = vld [vmem:[#allocation14 + $0x20] sm:$0xf]
    %v1648 = vld [vmem:[#allocation14 + $0x24] sm:$0xf]
    %v1649 = vld [vmem:[#allocation14 + $0x28] sm:$0xf]
    %v1650 = vld [vmem:[#allocation14 + $0x2c] sm:$0xf]
    %v1651 = vld [vmem:[#allocation14 + $0x30] sm:$0xf]
    %v1652 = vld [vmem:[#allocation14 + $0x34] sm:$0xf]
    %v1653 = vld [vmem:[#allocation14 + $0x38] sm:$0xf]
    %v1654 = vld [vmem:[#allocation14 + $0x3c] sm:$0xf]
    %v1655 = vld [vmem:[%s12] sm:$0x1]
    %v1657 = vlaneseq
    %v1658 = vshrl.u32 %v1657, 7
    %v1659 = vsub.s32 0, %v1658
    %v1660 = vrot.slane %v1655, %v1659
    %v1678 = vunpack.c.l.b16 %v1639
    %v1679 = vunpack.c.l.b16 %v1640
    %v1680 = vunpack.c.l.b16 %v1641
    %v1681 = vunpack.c.l.b16 %v1642
    %v1682 = vunpack.c.l.b16 %v1643
    %v1683 = vunpack.c.l.b16 %v1644
    %v1684 = vunpack.c.l.b16 %v1645
    %v1685 = vunpack.c.l.b16 %v1646
    %v1686 = vunpack.c.l.b16 %v1647
    %v1687 = vunpack.c.l.b16 %v1648
    %v1688 = vunpack.c.l.b16 %v1649
    %v1689 = vunpack.c.l.b16 %v1650
    %v1690 = vunpack.c.l.b16 %v1651
    %v1691 = vunpack.c.l.b16 %v1652
    %v1692 = vunpack.c.l.b16 %v1653
    %v1693 = vunpack.c.l.b16 %v1654
    %v1694 = vpack.c.b16 %v1679, %v1678
    %v1695 = vpack.c.b16 %v1681, %v1680
    %v1696 = vpack.c.b16 %v1683, %v1682
    %v1697 = vpack.c.b16 %v1685, %v1684
    %v1698 = vpack.c.b16 %v1687, %v1686
    %v1699 = vpack.c.b16 %v1689, %v1688
    %v1700 = vpack.c.b16 %v1691, %v1690
    %v1701 = vpack.c.b16 %v1693, %v1692
    %1710 = vmatprep.subr.bf16.mxu0 0
    %1711 = vmatpush1.bf16.msra.mxu0 %v1694
    %1712 = vmatprep.subr.bf16.mxu0 0
    %1713 = vmatpush1.bf16.msra.mxu0 %v1695
    %1714 = vmatprep.subr.bf16.mxu0 0
    %1715 = vmatpush1.bf16.msra.mxu0 %v1696
    %1716 = vmatprep.subr.bf16.mxu0 0
    %1717 = vmatpush1.bf16.msra.mxu0 %v1697
    %1718 = vmatprep.subr.bf16.mxu0 0
    %1719 = vmatpush1.bf16.msra.mxu0 %v1698
    %1720 = vmatprep.subr.bf16.mxu0 0
    %1721 = vmatpush1.bf16.msra.mxu0 %v1699
    %1722 = vmatprep.subr.bf16.mxu0 0
    %1723 = vmatpush1.bf16.msra.mxu0 %v1700
    %1724 = vmatprep.subr.bf16.mxu0 0
    %1725 = vmatpush1.bf16.msra.mxu0 %v1701
    %1726 = vmatprep.subr.bf16.mxu0 0
    %1727 = vmatpush1.bf16.msra.mxu0 0
    %1728 = vmatprep.subr.bf16.mxu0 0
    %1729 = vmatpush1.bf16.msra.mxu0 0
    %1730 = vmatprep.subr.bf16.mxu0 0
    %1731 = vmatpush1.bf16.msra.mxu0 0
    %1732 = vmatprep.subr.bf16.mxu0 0
    %1733 = vmatpush1.bf16.msra.mxu0 0
    %1734 = vmatprep.subr.bf16.mxu0 0
    %1735 = vmatpush1.bf16.msra.mxu0 0
    %1736 = vmatprep.subr.bf16.mxu0 0
    %1737 = vmatpush1.bf16.msra.mxu0 0
    %1738 = vmatprep.subr.bf16.mxu0 0
    %1739 = vmatpush1.bf16.msra.mxu0 0
    %1740 = vmatprep.subr.bf16.mxu0 0
    %1741 = vmatpush1.bf16.msra.mxu0 0
    %1742 = vmatprep.mubr.bf16.mxu0 0
    %1743 = vmatmul.mubr.bf16.gmra.mrb[0].mxu0 %v1638
    %v1744 = vpop.f32.mrb[0].mxu0
    %v1745 = vadd.f32 %v1660, %v1744
    %v1746 = vpop.f32.mrb[0].mxu0
    %v1747 = vpop.f32.mrb[0].mxu0
    %v1748 = vadd.f32 %v1660, %v1747
    %v1749 = vpop.f32.mrb[0].mxu0
    %1750 = vdwg.mxu0
    %v1751 = vmax.f32 %v1745, 0.0
    %v1752 = vmax.f32 %v1748, 0.0
    %v1753 = vpack.c.bf16 %v1752, %v1751
    %v1754 = vld [vmem:[#allocation16] sm:$0xf]
    %v1755 = vld [vmem:[#allocation16 + $0x4] sm:$0xf]
    %v1756 = vld [vmem:[#allocation16 + $0x8] sm:$0xf]
    %v1757 = vld [vmem:[#allocation16 + $0xc] sm:$0xf]
    %v1758 = vld [vmem:[#allocation16 + $0x10] sm:$0xf]
    %v1759 = vld [vmem:[#allocation16 + $0x14] sm:$0xf]
    %v1760 = vld [vmem:[#allocation16 + $0x18] sm:$0xf]
    %v1761 = vld [vmem:[#allocation16 + $0x1c] sm:$0xf]
    %v1762 = vld [vmem:[#allocation16 + $0x20] sm:$0xf]
    %v1763 = vld [vmem:[#allocation16 + $0x24] sm:$0xf]
    %v1764 = vld [vmem:[#allocation16 + $0x28] sm:$0xf]
    %v1765 = vld [vmem:[#allocation16 + $0x2c] sm:$0xf]
    %v1766 = vld [vmem:[#allocation16 + $0x30] sm:$0xf]
    %v1767 = vld [vmem:[#allocation16 + $0x34] sm:$0xf]
    %v1768 = vld [vmem:[#allocation16 + $0x38] sm:$0xf]
    %v1769 = vld [vmem:[#allocation16 + $0x3c] sm:$0xf]
    %v1770 = vld [vmem:[%s14] sm:$0x1]
    %v1772 = vlaneseq
    %v1773 = vshrl.u32 %v1772, 7
    %v1774 = vsub.s32 0, %v1773
    %v1775 = vrot.slane %v1770, %v1774
    %v1793 = vunpack.c.l.b16 %v1754
    %v1794 = vunpack.c.l.b16 %v1755
    %v1795 = vunpack.c.l.b16 %v1756
    %v1796 = vunpack.c.l.b16 %v1757
    %v1797 = vunpack.c.l.b16 %v1758
    %v1798 = vunpack.c.l.b16 %v1759
    %v1799 = vunpack.c.l.b16 %v1760
    %v1800 = vunpack.c.l.b16 %v1761
    %v1801 = vunpack.c.l.b16 %v1762
    %v1802 = vunpack.c.l.b16 %v1763
    %v1803 = vunpack.c.l.b16 %v1764
    %v1804 = vunpack.c.l.b16 %v1765
    %v1805 = vunpack.c.l.b16 %v1766
    %v1806 = vunpack.c.l.b16 %v1767
    %v1807 = vunpack.c.l.b16 %v1768
    %v1808 = vunpack.c.l.b16 %v1769
    %v1809 = vpack.c.b16 %v1794, %v1793
    %v1810 = vpack.c.b16 %v1796, %v1795
    %v1811 = vpack.c.b16 %v1798, %v1797
    %v1812 = vpack.c.b16 %v1800, %v1799
    %v1813 = vpack.c.b16 %v1802, %v1801
    %v1814 = vpack.c.b16 %v1804, %v1803
    %v1815 = vpack.c.b16 %v1806, %v1805
    %v1816 = vpack.c.b16 %v1808, %v1807
    %1825 = vmatprep.subr.bf16.mxu0 0
    %1826 = vmatpush1.bf16.msra.mxu0 %v1809
    %1827 = vmatprep.subr.bf16.mxu0 0
    %1828 = vmatpush1.bf16.msra.mxu0 %v1810
    %1829 = vmatprep.subr.bf16.mxu0 0
    %1830 = vmatpush1.bf16.msra.mxu0 %v1811
    %1831 = vmatprep.subr.bf16.mxu0 0
    %1832 = vmatpush1.bf16.msra.mxu0 %v1812
    %1833 = vmatprep.subr.bf16.mxu0 0
    %1834 = vmatpush1.bf16.msra.mxu0 %v1813
    %1835 = vmatprep.subr.bf16.mxu0 0
    %1836 = vmatpush1.bf16.msra.mxu0 %v1814
    %1837 = vmatprep.subr.bf16.mxu0 0
    %1838 = vmatpush1.bf16.msra.mxu0 %v1815
    %1839 = vmatprep.subr.bf16.mxu0 0
    %1840 = vmatpush1.bf16.msra.mxu0 %v1816
    %1841 = vmatprep.subr.bf16.mxu0 0
    %1842 = vmatpush1.bf16.msra.mxu0 0
    %1843 = vmatprep.subr.bf16.mxu0 0
    %1844 = vmatpush1.bf16.msra.mxu0 0
    %1845 = vmatprep.subr.bf16.mxu0 0
    %1846 = vmatpush1.bf16.msra.mxu0 0
    %1847 = vmatprep.subr.bf16.mxu0 0
    %1848 = vmatpush1.bf16.msra.mxu0 0
    %1849 = vmatprep.subr.bf16.mxu0 0
    %1850 = vmatpush1.bf16.msra.mxu0 0
    %1851 = vmatprep.subr.bf16.mxu0 0
    %1852 = vmatpush1.bf16.msra.mxu0 0
    %1853 = vmatprep.subr.bf16.mxu0 0
    %1854 = vmatpush1.bf16.msra.mxu0 0
    %1855 = vmatprep.subr.bf16.mxu0 0
    %1856 = vmatpush1.bf16.msra.mxu0 0
    %1857 = vmatprep.mubr.bf16.mxu0 0
    %1858 = vmatmul.mubr.bf16.gmra.mrb[0].mxu0 %v1753
    %v1859 = vpop.f32.mrb[0].mxu0
    %v1860 = vadd.f32 %v1775, %v1859
    %v1861 = vpop.f32.mrb[0].mxu0
    %v1862 = vpop.f32.mrb[0].mxu0
    %v1863 = vadd.f32 %v1775, %v1862
    %v1864 = vpop.f32.mrb[0].mxu0
    %1865 = vdwg.mxu0
    %v1866 = vpack.c.bf16 %v1863, %v1860
    %v1868 = vunpack.c.l.b16 %v1866
    %v1869 = vunpack.c.h.b16 %v1866
    %v1870 = vpack.c.b16 %v1868, %v1868
    %v1871 = vpack.c.b16 %v1869, %v1869
    %1874 = vst [vmem:[#allocation17] sm:$0xf] %v1870
    %1875 = vst [vmem:[#allocation17 + $0x4] sm:$0xf] %v1871
    // Predicated region
    $region98: #{tpu_custom_call.1} parent=1 // pred_check
      _
    $region99: #{tpu_custom_call.1} parent=1 // pred_check_branch
      %1877 = sbr.rel (0) target = $region101
    $region100: #{tpu_custom_call.1} parent=1 // pred_region
      %s1879 = ssub.s32 128, 128
      %1880 = vsyncadd [#allocation4], %s1879
      %s1881 = sshll.u32 [#allocation17], 4
      %s1882 = int_to_ptr.vmem [resolvable:$true] %s1881
      %1887 = dma.vmem_to_hbm [thread:$0]  %s1882, 128, %s15, [#allocation4], 64, 64, 4
    $region101: #{tpu_custom_call.1} parent=1 // pred_fallthru
      _
    // Predicated region
    $region102: #{tpu_custom_call.1} parent=1 // pred_check
      _
    $region103: #{tpu_custom_call.1} parent=1 // pred_check_branch
      %1889 = sbr.rel (0) target = $region105
    $region104: #{tpu_custom_call.1} parent=1 // pred_region
      %1890 = dma.done [#allocation4], 128
    $region105: #{tpu_custom_call.1} parent=1 // pred_fallthru
      _
    %1891 = vsyncpa [#allocation3], 1
    %1892 = vsyncpa [#allocation6], 1
    %1893 = vsyncpa [#allocation9], 1
    %1894 = vsyncpa [#allocation12], 1
    %1895 = vsyncpa [#allocation15], 1
    %1896 = vsyncpa [#allocation4], 1

</llo_original>
